<compile_context>
chip_gen: v7x
topology: tpu7x:2x2x1
jax: 0.10.0
libtpu: 0.0.40
codegen_flags: <defaults>
</compile_context>

<pallas_src>
import functools

import jax
import jax.numpy as jnp
import numpy as np
from jax.experimental import pallas as pl
from jax.experimental.pallas import tpu as pltpu


def _round_up(x, m):
  return ((x + m - 1) // m) * m


# ----------------------------------------------------------------------------
# Fused kernel: grid = (B, P // TP)
# ----------------------------------------------------------------------------
def _criterion_kernel(
    logits_ref,      # (1, Q, C1)   f32
    weight_ref,      # (1, C1)      f32   class weights (eos weight last)
    tgt_cls_ref,     # (1, Q, 1)    i32   precomputed target classes per query
    pred_masks_ref,  # (1, TP, Q)   f32   native [B, P, Q] layout, P tile
    tgt_masks_ref,   # (1, Tm, TP)  bf16  pre-gathered by target_ids, padded
    pred_org_ref,    # (1, Q, 3)    f32
    pred_axs_ref,    # (1, Q, 3)    f32
    tgt_org_ref,     # (1, Tm, 3)   f32   pre-gathered, padded
    tgt_axs_ref,     # (1, Tm, 3)   f32
    map_ids_ref,     # (1, Tm, 1)   i32   matched query id per pair, padded
    nt_ref,          # (1, 1, 1)    f32   #matched pairs in this batch element
    out_ref,         # (1, 8, 128)  f32   row 0 lanes 0..5: ce_num, ce_den, mask,
                     #                    dice, origin, axis  (per batch element)
    acc_bce,         # (Tm, 1) f32 scratch — sum over P of BCE per target row
    acc_st,          # (Tm, 1) f32 scratch — sum over P of sigmoid*target
    acc_s,           # (Tm, 1) f32 scratch — sum over P of sigmoid
    acc_t,           # (Tm, 1) f32 scratch — sum over P of target
    *, ignore_index, p_real, tp):
  f32 = jnp.float32
  p = pl.program_id(1)
  n_pt = pl.num_programs(1)

  Tm = map_ids_ref.shape[1]
  Q = pred_masks_ref.shape[2]
  C1 = logits_ref.shape[2]

  # ---- matched-query one-hot (zeroed on padded pairs); cheap, recomputed per tile.
  nt = nt_ref[0].astype(f32)                                          # [1, 1]
  t_iota = jax.lax.broadcasted_iota(jnp.int32, (Tm, 1), 0).astype(f32)
  valid = (t_iota < nt).astype(f32)                                   # [Tm, 1]
  q_iota = jax.lax.broadcasted_iota(jnp.int32, (Tm, Q), 1)
  oh_map = (q_iota == map_ids_ref[0]).astype(f32) * valid             # [Tm, Q]

  @pl.when(p == 0)
  def _init():
    acc_bce[...] = jnp.zeros_like(acc_bce)
    acc_st[...] = jnp.zeros_like(acc_st)
    acc_s[...] = jnp.zeros_like(acc_s)
    acc_t[...] = jnp.zeros_like(acc_t)

  # ------------------------------------------------ per-P-tile mask partials
  m_tile = pred_masks_ref[0].astype(f32)                              # [TP, Q]
  # pred_masks[b][:, map_id].T for this P tile, via one MXU matmul (A @ B^T).
  x = jnp.einsum('tq,pq->tp', oh_map, m_tile,
                 preferred_element_type=f32)                          # [Tm, TP]
  t = tgt_masks_ref[0].astype(f32)                                    # [Tm, TP]

  lane = jax.lax.broadcasted_iota(jnp.int32, (1, tp), 1)
  pt_mask = ((lane + p * tp) < p_real).astype(f32)                    # [1, TP]

  # 2 transcendentals / element: tanh for sigmoid, log for the softplus term.
  sig = 0.5 * jnp.tanh(0.5 * x) + 0.5                                 # sigmoid(x)
  sig_abs = jnp.where(x >= 0.0, sig, 1.0 - sig)                       # sigmoid(|x|) >= 0.5
  bce = (jnp.maximum(x, 0.0) - x * t - jnp.log(sig_abs)) * pt_mask    # stable BCE-with-logits
  sig = sig * pt_mask

  acc_bce[...] += jnp.sum(bce, axis=1, keepdims=True)
  acc_st[...] += jnp.sum(sig * t, axis=1, keepdims=True)
  acc_s[...] += jnp.sum(sig, axis=1, keepdims=True)
  acc_t[...] += jnp.sum(t, axis=1, keepdims=True)

  # --------------------------------------------------------- per-batch finalize
  @pl.when(p == n_pt - 1)
  def _finalize():
    inv_nm = 1.0 / jnp.maximum(nt, 1.0)                               # [1, 1]
    inv_p = 1.0 / float(p_real)

    # masks: sigmoid-BCE (mean over points, sum over pairs / num_masks_b)
    mask_b = jnp.sum(acc_bce[...] * valid, axis=0, keepdims=True) * inv_p * inv_nm

    # dice
    numr = 2.0 * acc_st[...]
    denr = acc_s[...] + acc_t[...]
    dice_rows = (1.0 - (numr + 1.0) / (denr + 1.0)) * valid
    dice_b = jnp.sum(dice_rows, axis=0, keepdims=True) * inv_nm

    # weighted CE partials (global normalization is done in the wrapper)
    logits = logits_ref[0].astype(f32)                                # [Q, C1]
    w = weight_ref[...].astype(f32)                                   # [1, C1]
    mx = jnp.max(logits, axis=-1, keepdims=True)
    lse = jnp.log(jnp.sum(jnp.exp(logits - mx), axis=-1, keepdims=True)) + mx
    logp = logits - lse
    tgt_cls = tgt_cls_ref[0]                                          # [Q, 1] i32
    c_iota = jax.lax.broadcasted_iota(jnp.int32, (Q, C1), 1)
    oh_cls = (c_iota == tgt_cls).astype(f32)                          # [Q, C1]
    nll = -jnp.sum(logp * oh_cls, axis=-1, keepdims=True)             # [Q, 1]
    wi = jnp.sum(oh_cls * w, axis=-1, keepdims=True)                  # [Q, 1]
    keep = (tgt_cls != ignore_index).astype(f32)                      # [Q, 1]
    ce_num = jnp.sum(nll * wi * keep, axis=0, keepdims=True)          # [1, 1]
    ce_den = jnp.sum(wi * keep, axis=0, keepdims=True)                # [1, 1]

    # articulations: single MXU gather of the matched 3-vectors, L1 / num_masks_b
    po = pred_org_ref[0].astype(f32)                                  # [Q, 3]
    pa = pred_axs_ref[0].astype(f32)
    to = tgt_org_ref[0].astype(f32)                                   # [Tm, 3]
    ta = tgt_axs_ref[0].astype(f32)
    g_po = jnp.einsum('tq,qd->td', oh_map, po, preferred_element_type=f32)
    g_pa = jnp.einsum('tq,qd->td', oh_map, pa, preferred_element_type=f32)
    origin_b = jnp.sum(jnp.sum(jnp.abs(g_po - to), axis=1, keepdims=True) * valid,
                       axis=0, keepdims=True) * inv_nm
    axis_b = jnp.sum(jnp.sum(jnp.abs(g_pa - ta), axis=1, keepdims=True) * valid,
                     axis=0, keepdims=True) * inv_nm

    # lane-dense (8,128) per-batch output row (full unmasked vst)
    lane_o = jax.lax.broadcasted_iota(jnp.int32, (8, 128), 1)
    sub_o = jax.lax.broadcasted_iota(jnp.int32, (8, 128), 0)

    def hot(k):
      return ((sub_o == 0) & (lane_o == k)).astype(f32)

    out_ref[0] = (ce_num * hot(0) + ce_den * hot(1) + mask_b * hot(2)
                  + dice_b * hot(3) + origin_b * hot(4) + axis_b * hot(5))


# ----------------------------------------------------------------------------
# Wrapper: one pallas_call over grid (B, P//TP)
# ----------------------------------------------------------------------------
@functools.partial(jax.jit, static_argnames=("p_real", "tp"))
def _fused_forward(pred_logits, pred_masks, pred_origins, pred_axises,
                   tgt_masks, tgt_org, tgt_axs, tgt_cls, map_ids, nt,
                   empty_weight, *, p_real, tp):
  B, Q, C1 = pred_logits.shape
  P = pred_masks.shape[1]
  Tm = tgt_masks.shape[1]
  P_pad = tgt_masks.shape[2]
  if P_pad != P:
    # TODO(synk): pick a point_tile dividing P (or pre-pad upstream) to avoid this copy.
    pred_masks = jnp.pad(pred_masks, ((0, 0), (0, P_pad - P), (0, 0)))
  n_pt = P_pad // tp

  kern = functools.partial(_criterion_kernel, ignore_index=253,
                           p_real=p_real, tp=tp)
  out = pl.pallas_call(
      kern,
      grid=(B, n_pt),
      in_specs=[
          pl.BlockSpec((1, Q, C1), lambda b, p: (b, 0, 0)),     # pred_logits
          pl.BlockSpec((1, C1), lambda b, p: (0, 0)),           # empty_weight
          pl.BlockSpec((1, Q, 1), lambda b, p: (b, 0, 0)),      # tgt_cls
          pl.BlockSpec((1, tp, Q), lambda b, p: (b, p, 0)),     # pred_masks (P tiled)
          pl.BlockSpec((1, Tm, tp), lambda b, p: (b, 0, p)),    # tgt_masks (P tiled)
          pl.BlockSpec((1, Q, 3), lambda b, p: (b, 0, 0)),      # pred_origins
          pl.BlockSpec((1, Q, 3), lambda b, p: (b, 0, 0)),      # pred_axises
          pl.BlockSpec((1, Tm, 3), lambda b, p: (b, 0, 0)),     # tgt_origins
          pl.BlockSpec((1, Tm, 3), lambda b, p: (b, 0, 0)),     # tgt_axises
          pl.BlockSpec((1, Tm, 1), lambda b, p: (b, 0, 0)),     # map_ids
          pl.BlockSpec((1, 1, 1), lambda b, p: (b, 0, 0)),      # nt
      ],
      out_specs=pl.BlockSpec((1, 8, 128), lambda b, p: (b, 0, 0)),
      out_shape=jax.ShapeDtypeStruct((B, 8, 128), jnp.float32),
      scratch_shapes=[pltpu.VMEM((Tm, 1), jnp.float32)] * 4,
      compiler_params=pltpu.CompilerParams(
          dimension_semantics=("parallel", "arbitrary"),
          vmem_limit_bytes=32 * 1024 * 1024),
  )(pred_logits, empty_weight, tgt_cls, pred_masks, tgt_masks,
    pred_origins, pred_axises, tgt_org, tgt_axs, map_ids, nt)

  row = out[:, 0, :]                                             # [B, 128]
  ce_num = jnp.sum(row[:, 0])
  ce_den = jnp.sum(row[:, 1])
  loss_ce = jnp.where(ce_den > 0.0, ce_num / jnp.maximum(ce_den, 1e-20), 0.0)
  loss_mask = jnp.sum(row[:, 2])
  loss_dice = jnp.sum(row[:, 3])
  loss_origin = jnp.sum(row[:, 4])
  loss_axis = jnp.sum(row[:, 5])
  return loss_ce, loss_mask, loss_dice, loss_origin, loss_axis


# ----------------------------------------------------------------------------
# Criterion wrapper (host-side NumPy packing; all compute in one kernel)
# ----------------------------------------------------------------------------
class SetCriterionPallas:
  def __init__(self, num_classes, eos_coef, losses, num_points=-1,
               class_weights=-1, regular_arti_loss=True, point_tile=1024):
    self.num_classes = num_classes - 1
    self.eos_coef = eos_coef
    self.losses = losses
    self.num_points = num_points
    self.regular_arti_loss = regular_arti_loss
    self.point_tile = max(128, _round_up(point_tile, 128))
    ew = np.ones(self.num_classes + 1, dtype=np.float32)
    ew[-1] = eos_coef
    if class_weights != -1:
      assert len(class_weights) == self.num_classes
      ew[:-1] = np.asarray(class_weights, dtype=np.float32)
    self.empty_weight = jnp.asarray(ew).reshape(1, -1)           # [1, C+1]

  # deterministic identity "matcher"  (TODO(synk): Hungarian assignment module)
  def _match(self, outputs, targets):
    return [(np.arange(len(t["labels"])), np.arange(len(t["labels"])))
            for t in targets]

  def forward(self, outputs, targets, mask_type="masks"):
    # TODO(synk): num_points != -1 (random point subsampling), the non-regular
    # articulation branch, interaction losses and aux_outputs are not implemented.
    indices = self._match(outputs, targets)
    pred_logits = outputs["pred_logits"]
    B, Q, _ = pred_logits.shape
    P = outputs["pred_masks"].shape[1]

    # Bucket Tm to a multiple of 8 so varying max-#targets doesn't recompile.
    t_max = max([1] + [len(mi) for mi, _ in indices])
    Tm = _round_up(t_max, 8)
    TP = min(self.point_tile, _round_up(P, 128))
    P_pad = _round_up(P, TP)

    # Host-side packing (NumPy), one device transfer per packed array.
    map_ids = np.zeros((B, Tm, 1), np.int32)
    nt = np.zeros((B, 1, 1), np.float32)
    tgt_cls = np.full((B, Q, 1), self.num_classes, np.int32)
    tgt_masks = np.zeros((B, Tm, P_pad), np.float32)
    tgt_org = np.zeros((B, Tm, 3), np.float32)
    tgt_axs = np.zeros((B, Tm, 3), np.float32)
    for b, (mi, ti) in enumerate(indices):
      mi = np.asarray(mi, np.int32)
      ti = np.asarray(ti, np.int32)
      n = len(mi)
      nt[b, 0, 0] = n
      if n == 0:
        continue
      map_ids[b, :n, 0] = mi
      labels_b = np.asarray(targets[b]["labels"]).astype(np.int32)
      tgt_cls[b, mi, 0] = labels_b[ti]                           # scatter matched labels
      m = np.asarray(targets[b][mask_type], np.float32)          # [T_b, P]
      tgt_masks[b, :n, :P] = m[ti]
      arti = targets[b].get("articulations", None)
      if arti is not None:
        tgt_org[b, :n] = np.asarray(arti["origin"], np.float32)[ti]
        tgt_axs[b, :n] = np.asarray(arti["axis"], np.float32)[ti]

    ce, lm, ld, lo, la = _fused_forward(
        pred_logits, outputs["pred_masks"],
        outputs["pred_origins"], outputs["pred_axises"],
        jnp.asarray(tgt_masks, jnp.bfloat16),                    # 0/1 exact in bf16
        jnp.asarray(tgt_org), jnp.asarray(tgt_axs),
        jnp.asarray(tgt_cls), jnp.asarray(map_ids), jnp.asarray(nt),
        self.empty_weight, p_real=P, tp=TP)

    losses = {}
    for loss in self.losses:
      if loss == "labels":
        losses["loss_ce"] = ce
      elif loss == "masks":
        losses["loss_mask"] = lm
        losses["loss_dice"] = ld
      elif loss == "articulations":
        losses["loss_origin"] = lo
        losses["loss_axis"] = la
      else:
        raise ValueError(loss)
    return losses


# ----------------------------------------------------------------------------
# Pure-JAX reference (identity matching) for a sanity check
# ----------------------------------------------------------------------------
def _reference(outputs, targets, num_classes, empty_weight):
  B, Q, C1 = outputs["pred_logits"].shape
  tgt_cls = np.full((B, Q), num_classes, np.int32)
  for b, t in enumerate(targets):
    lab = np.asarray(t["labels"], np.int32)
    tgt_cls[b, :lab.shape[0]] = lab
  logits = outputs["pred_logits"].astype(jnp.float32)
  logp = jax.nn.log_softmax(logits, axis=-1)
  oh = jax.nn.one_hot(jnp.asarray(tgt_cls), C1, dtype=jnp.float32)
  nll = -(logp * oh).sum(-1)
  w = (oh * empty_weight.reshape(1, 1, -1)).sum(-1)
  ce = (nll * w).sum() / w.sum()

  lm = ld = lo = la = jnp.float32(0.0)
  for b, t in enumerate(targets):
    n = t["masks"].shape[0]
    pred = outputs["pred_masks"][b][:, :n].T
    tgt = jnp.asarray(t["masks"], jnp.float32)
    bce = jnp.maximum(pred, 0.) - pred * tgt + jnp.log1p(jnp.exp(-jnp.abs(pred)))
    lm = lm + bce.mean(1).sum() / n
    s = jax.nn.sigmoid(pred)
    ld = ld + (1. - (2. * (s * tgt).sum(1) + 1.) / (s.sum(1) + tgt.sum(1) + 1.)).sum() / n
    po = outputs["pred_origins"][b][:n]
    pa = outputs["pred_axises"][b][:n]
    to = jnp.asarray(t["articulations"]["origin"], jnp.float32)
    ta = jnp.asarray(t["articulations"]["axis"], jnp.float32)
    lo = lo + jnp.abs(po - to).sum() / n
    la = la + jnp.abs(pa - ta).sum() / n
  return {"loss_ce": ce, "loss_mask": lm, "loss_dice": ld,
          "loss_origin": lo, "loss_axis": la}


# ----------------------------------------------------------------------------
if __name__ == "__main__":
  key = jax.random.PRNGKey(0)
  B, Q, P, T = 2, 8, 333, 4              # P=333 exercises the partial last P tile
  NUM_CLASSES_TOTAL = 5                  # module arg; internal num_classes = 4

  ks = jax.random.split(key, 8)
  outputs = {
      "pred_logits":  jax.random.normal(ks[0], (B, Q, NUM_CLASSES_TOTAL), jnp.float32),
      "pred_masks":   jax.random.normal(ks[1], (B, P, Q), jnp.float32),
      "pred_origins": jax.random.normal(ks[2], (B, Q, 3), jnp.float32),
      "pred_axises":  jax.random.normal(ks[3], (B, Q, 3), jnp.float32),
  }
  targets = []
  for b in range(B):
    kb = jax.random.split(ks[4 + b], 4)
    targets.append({
        "labels": np.asarray(jax.random.randint(kb[0], (T,), 0, NUM_CLASSES_TOTAL - 1),
                             dtype=np.int32),
        "masks": np.asarray(jax.random.uniform(kb[1], (T, P)) > 0.5, np.float32),
        "articulations": {
            "origin": np.asarray(jax.random.normal(kb[2], (T, 3), jnp.float32)),
            "axis":   np.asarray(jax.random.normal(kb[3], (T, 3), jnp.float32)),
        },
    })

  criterion = SetCriterionPallas(
      num_classes=NUM_CLASSES_TOTAL, eos_coef=0.1,
      losses=["labels", "masks", "articulations"],
      num_points=-1, class_weights=-1, regular_arti_loss=True,
      point_tile=128)                    # small tile so the demo runs a 3-step P grid

  losses = criterion.forward(outputs, targets, mask_type="masks")
  losses = {k: jax.block_until_ready(v) for k, v in losses.items()}
  assert all(np.isfinite(np.asarray(v)) for v in losses.values())

  ref = _reference(outputs, targets, criterion.num_classes, criterion.empty_weight)
  for k in losses:
    np.testing.assert_allclose(np.asarray(losses[k]), np.asarray(ref[k]),
                               rtol=5e-2, atol=1e-3)
  print("KERNEL_OK")
</pallas_src>

<mosaic_0001>
module attributes {stable_mosaic.version = 11 : i64} {
  func.func @_criterion_kernel(%arg0: i32, %arg1: i32, %arg2: memref<1x8x5xf32, #tpu.memory_space<vmem>>, %arg3: memref<1x5xf32, #tpu.memory_space<vmem>>, %arg4: memref<1x8x1xi32, #tpu.memory_space<vmem>>, %arg5: memref<1x128x8xf32, #tpu.memory_space<vmem>>, %arg6: memref<1x8x128xbf16, #tpu.memory_space<vmem>>, %arg7: memref<1x8x3xf32, #tpu.memory_space<vmem>>, %arg8: memref<1x8x3xf32, #tpu.memory_space<vmem>>, %arg9: memref<1x8x3xf32, #tpu.memory_space<vmem>>, %arg10: memref<1x8x3xf32, #tpu.memory_space<vmem>>, %arg11: memref<1x8x1xi32, #tpu.memory_space<vmem>>, %arg12: memref<1x1x1xf32, #tpu.memory_space<vmem>>, %arg13: memref<1x8x128xf32, #tpu.memory_space<vmem>>, %arg14: memref<8x1xf32, #tpu.memory_space<vmem>>, %arg15: memref<8x1xf32, #tpu.memory_space<vmem>>, %arg16: memref<8x1xf32, #tpu.memory_space<vmem>>, %arg17: memref<8x1xf32, #tpu.memory_space<vmem>>) attributes {dimension_semantics = [#tpu.dimension_semantics<parallel>, #tpu.dimension_semantics<arbitrary>], iteration_bounds = array<i64: 2, 3>, scalar_prefetch = 0 : i64, scratch_operands = 4 : i64, tpu.core_type = #tpu.core_type<tc>, window_params = [{transform_indices = @transform_0, window_bounds = array<i64: 1, 8, 5>}, {pipeline_mode = #tpu.pipeline_mode<synchronous>, transform_indices = @transform_1, window_bounds = array<i64: 1, 5>}, {transform_indices = @transform_2, window_bounds = array<i64: 1, 8, 1>}, {transform_indices = @transform_3, window_bounds = array<i64: 1, 128, 8>}, {transform_indices = @transform_4, window_bounds = array<i64: 1, 8, 128>}, {transform_indices = @transform_5, window_bounds = array<i64: 1, 8, 3>}, {transform_indices = @transform_6, window_bounds = array<i64: 1, 8, 3>}, {transform_indices = @transform_7, window_bounds = array<i64: 1, 8, 3>}, {transform_indices = @transform_8, window_bounds = array<i64: 1, 8, 3>}, {transform_indices = @transform_9, window_bounds = array<i64: 1, 8, 1>}, {transform_indices = @transform_10, window_bounds = array<i64: 1, 1, 1>}, {transform_indices = @transform_11, window_bounds = array<i64: 1, 8, 128>}]} {
    %c0 = arith.constant 0 : index
    %c0_0 = arith.constant 0 : index
    %c0_1 = arith.constant 0 : index
    %0 = vector.load %arg12[%c0, %c0_0, %c0_1] : memref<1x1x1xf32, #tpu.memory_space<vmem>>, vector<1x1x1xf32>
    %1 = vector.shape_cast %0 : vector<1x1x1xf32> to vector<1x1xf32>
    %2 = tpu.iota {dimensions = array<i32: 0>} : vector<8x1xi32>
    %3 = arith.sitofp %2 : vector<8x1xi32> to vector<8x1xf32>
    %4 = vector.broadcast %1 : vector<1x1xf32> to vector<8x1xf32>
    %5 = arith.cmpf olt, %3, %4 : vector<8x1xf32>
    %6 = arith.extui %5 : vector<8x1xi1> to vector<8x1xi32>
    %7 = arith.sitofp %6 : vector<8x1xi32> to vector<8x1xf32>
    %8 = tpu.iota {dimensions = array<i32: 1>} : vector<8x8xi32>
    %c0_2 = arith.constant 0 : index
    %c0_3 = arith.constant 0 : index
    %c0_4 = arith.constant 0 : index
    %9 = vector.load %arg11[%c0_2, %c0_3, %c0_4] : memref<1x8x1xi32, #tpu.memory_space<vmem>>, vector<1x8x1xi32>
    %10 = vector.shape_cast %9 : vector<1x8x1xi32> to vector<8x1xi32>
    %11 = vector.broadcast %10 : vector<8x1xi32> to vector<8x8xi32>
    %12 = arith.cmpi eq, %8, %11 : vector<8x8xi32>
    %13 = arith.extui %12 : vector<8x8xi1> to vector<8x8xi32>
    %14 = arith.sitofp %13 : vector<8x8xi32> to vector<8x8xf32>
    %15 = vector.broadcast %7 : vector<8x1xf32> to vector<8x8xf32>
    %16 = arith.mulf %14, %15 : vector<8x8xf32>
    %c0_i32 = arith.constant 0 : i32
    %17 = arith.cmpi eq, %arg1, %c0_i32 : i32
    %18 = arith.extui %17 : i1 to i32
    %c0_i32_5 = arith.constant 0 : i32
    %19 = arith.cmpi ne, %18, %c0_i32_5 : i32
    scf.if %19 {
      %cst_39 = arith.constant 0.000000e+00 : f32
      %80 = vector.broadcast %cst_39 : f32 to vector<8x1xf32>
      %c0_40 = arith.constant 0 : index
      %c0_41 = arith.constant 0 : index
      %81 = vector.load %arg14[%c0_40, %c0_41] : memref<8x1xf32, #tpu.memory_space<vmem>>, vector<8x1xf32>
      tpu.vector_store %arg14[%c0_40, %c0_41], %80 {strides = array<i32>} : memref<8x1xf32, #tpu.memory_space<vmem>>, vector<8x1xf32>,
      %cst_42 = arith.constant 0.000000e+00 : f32
      %82 = vector.broadcast %cst_42 : f32 to vector<8x1xf32>
      %c0_43 = arith.constant 0 : index
      %c0_44 = arith.constant 0 : index
      %83 = vector.load %arg15[%c0_43, %c0_44] : memref<8x1xf32, #tpu.memory_space<vmem>>, vector<8x1xf32>
      tpu.vector_store %arg15[%c0_43, %c0_44], %82 {strides = array<i32>} : memref<8x1xf32, #tpu.memory_space<vmem>>, vector<8x1xf32>,
      %cst_45 = arith.constant 0.000000e+00 : f32
      %84 = vector.broadcast %cst_45 : f32 to vector<8x1xf32>
      %c0_46 = arith.constant 0 : index
      %c0_47 = arith.constant 0 : index
      %85 = vector.load %arg16[%c0_46, %c0_47] : memref<8x1xf32, #tpu.memory_space<vmem>>, vector<8x1xf32>
      tpu.vector_store %arg16[%c0_46, %c0_47], %84 {strides = array<i32>} : memref<8x1xf32, #tpu.memory_space<vmem>>, vector<8x1xf32>,
      %cst_48 = arith.constant 0.000000e+00 : f32
      %86 = vector.broadcast %cst_48 : f32 to vector<8x1xf32>
      %c0_49 = arith.constant 0 : index
      %c0_50 = arith.constant 0 : index
      %87 = vector.load %arg17[%c0_49, %c0_50] : memref<8x1xf32, #tpu.memory_space<vmem>>, vector<8x1xf32>
      tpu.vector_store %arg17[%c0_49, %c0_50], %86 {strides = array<i32>} : memref<8x1xf32, #tpu.memory_space<vmem>>, vector<8x1xf32>,
    } else {
    }
    %c0_6 = arith.constant 0 : index
    %c0_7 = arith.constant 0 : index
    %c0_8 = arith.constant 0 : index
    %20 = vector.load %arg5[%c0_6, %c0_7, %c0_8] : memref<1x128x8xf32, #tpu.memory_space<vmem>>, vector<1x128x8xf32>
    %21 = vector.shape_cast %20 : vector<1x128x8xf32> to vector<128x8xf32>
    "tpu.trace_start"() <{level = 10 : i32, message = "tq,pq->tp"}> : () -> ()
    %cst = arith.constant dense<0.000000e+00> : vector<8x128xf32>
    %22 = tpu.matmul %16, %21, %cst {dimension_numbers = #tpu.dot_dimension_numbers<[1], [1], [0], [0], [0, 0, 1, 0], [], []>} : vector<8x8xf32>, vector<128x8xf32>, vector<8x128xf32> -> vector<8x128xf32>
    "tpu.trace_stop"() : () -> ()
    %c0_9 = arith.constant 0 : index
    %c0_10 = arith.constant 0 : index
    %c0_11 = arith.constant 0 : index
    %23 = vector.load %arg6[%c0_9, %c0_10, %c0_11] : memref<1x8x128xbf16, #tpu.memory_space<vmem>>, vector<1x8x128xbf16>
    %24 = vector.shape_cast %23 : vector<1x8x128xbf16> to vector<8x128xbf16>
    %25 = arith.extf %24 : vector<8x128xbf16> to vector<8x128xf32>
    %26 = tpu.iota {dimensions = array<i32: 1>} : vector<1x128xi32>
    %c128_i32 = arith.constant 128 : i32
    %27 = arith.muli %arg1, %c128_i32 : i32
    %28 = vector.broadcast %27 : i32 to vector<1x128xi32>
    %29 = arith.addi %26, %28 : vector<1x128xi32>
    %c333_i32 = arith.constant 333 : i32
    %30 = vector.broadcast %c333_i32 : i32 to vector<1x128xi32>
    %31 = arith.cmpi slt, %29, %30 : vector<1x128xi32>
    %32 = arith.extui %31 : vector<1x128xi1> to vector<1x128xi32>
    %33 = arith.sitofp %32 : vector<1x128xi32> to vector<1x128xf32>
    %cst_12 = arith.constant 5.000000e-01 : f32
    %34 = vector.broadcast %cst_12 : f32 to vector<8x128xf32>
    %35 = arith.mulf %34, %22 : vector<8x128xf32>
    %36 = math.tanh %35 : vector<8x128xf32>
    %cst_13 = arith.constant 5.000000e-01 : f32
    %37 = vector.broadcast %cst_13 : f32 to vector<8x128xf32>
    %38 = arith.mulf %37, %36 : vector<8x128xf32>
    %cst_14 = arith.constant 5.000000e-01 : f32
    %39 = vector.broadcast %cst_14 : f32 to vector<8x128xf32>
    %40 = arith.addf %38, %39 : vector<8x128xf32>
    %cst_15 = arith.constant 0.000000e+00 : f32
    %41 = vector.broadcast %cst_15 : f32 to vector<8x128xf32>
    %42 = arith.cmpf oge, %22, %41 : vector<8x128xf32>
    %cst_16 = arith.constant 1.000000e+00 : f32
    %43 = vector.broadcast %cst_16 : f32 to vector<8x128xf32>
    %44 = arith.subf %43, %40 : vector<8x128xf32>
    %45 = arith.select %42, %40, %44 : vector<8x128xi1>, vector<8x128xf32>
    %cst_17 = arith.constant 0.000000e+00 : f32
    %46 = vector.broadcast %cst_17 : f32 to vector<8x128xf32>
    %47 = arith.maximumf %22, %46 : vector<8x128xf32>
    %48 = arith.mulf %22, %25 : vector<8x128xf32>
    %49 = arith.subf %47, %48 : vector<8x128xf32>
    %50 = math.log %45 : vector<8x128xf32>
    %51 = arith.subf %49, %50 : vector<8x128xf32>
    %52 = vector.broadcast %33 : vector<1x128xf32> to vector<8x128xf32>
    %53 = arith.mulf %51, %52 : vector<8x128xf32>
    %54 = vector.broadcast %33 : vector<1x128xf32> to vector<8x128xf32>
    %55 = arith.mulf %40, %54 : vector<8x128xf32>
    %c0_18 = arith.constant 0 : index
    %c0_19 = arith.constant 0 : index
    %56 = vector.load %arg14[%c0_18, %c0_19] : memref<8x1xf32, #tpu.memory_space<vmem>>, vector<8x1xf32>
    %cst_20 = arith.constant dense<0.000000e+00> : vector<8xf32>
    %57 = vector.multi_reduction <add>, %53, %cst_20 [1] : vector<8x128xf32> to vector<8xf32>
    %58 = vector.shape_cast %57 : vector<8xf32> to vector<8x1xf32>
    %59 = arith.addf %56, %58 : vector<8x1xf32>
    %c0_21 = arith.constant 0 : index
    %c0_22 = arith.constant 0 : index
    %60 = vector.load %arg14[%c0_21, %c0_22] : memref<8x1xf32, #tpu.memory_space<vmem>>, vector<8x1xf32>
    tpu.vector_store %arg14[%c0_21, %c0_22], %59 {strides = array<i32>} : memref<8x1xf32, #tpu.memory_space<vmem>>, vector<8x1xf32>,
    %c0_23 = arith.constant 0 : index
    %c0_24 = arith.constant 0 : index
    %61 = vector.load %arg15[%c0_23, %c0_24] : memref<8x1xf32, #tpu.memory_space<vmem>>, vector<8x1xf32>
    %62 = arith.mulf %55, %25 : vector<8x128xf32>
    %cst_25 = arith.constant dense<0.000000e+00> : vector<8xf32>
    %63 = vector.multi_reduction <add>, %62, %cst_25 [1] : vector<8x128xf32> to vector<8xf32>
    %64 = vector.shape_cast %63 : vector<8xf32> to vector<8x1xf32>
    %65 = arith.addf %61, %64 : vector<8x1xf32>
    %c0_26 = arith.constant 0 : index
    %c0_27 = arith.constant 0 : index
    %66 = vector.load %arg15[%c0_26, %c0_27] : memref<8x1xf32, #tpu.memory_space<vmem>>, vector<8x1xf32>
    tpu.vector_store %arg15[%c0_26, %c0_27], %65 {strides = array<i32>} : memref<8x1xf32, #tpu.memory_space<vmem>>, vector<8x1xf32>,
    %c0_28 = arith.constant 0 : index
    %c0_29 = arith.constant 0 : index
    %67 = vector.load %arg16[%c0_28, %c0_29] : memref<8x1xf32, #tpu.memory_space<vmem>>, vector<8x1xf32>
    %cst_30 = arith.constant dense<0.000000e+00> : vector<8xf32>
    %68 = vector.multi_reduction <add>, %55, %cst_30 [1] : vector<8x128xf32> to vector<8xf32>
    %69 = vector.shape_cast %68 : vector<8xf32> to vector<8x1xf32>
    %70 = arith.addf %67, %69 : vector<8x1xf32>
    %c0_31 = arith.constant 0 : index
    %c0_32 = arith.constant 0 : index
    %71 = vector.load %arg16[%c0_31, %c0_32] : memref<8x1xf32, #tpu.memory_space<vmem>>, vector<8x1xf32>
    tpu.vector_store %arg16[%c0_31, %c0_32], %70 {strides = array<i32>} : memref<8x1xf32, #tpu.memory_space<vmem>>, vector<8x1xf32>,
    %c0_33 = arith.constant 0 : index
    %c0_34 = arith.constant 0 : index
    %72 = vector.load %arg17[%c0_33, %c0_34] : memref<8x1xf32, #tpu.memory_space<vmem>>, vector<8x1xf32>
    %cst_35 = arith.constant dense<0.000000e+00> : vector<8xf32>
    %73 = vector.multi_reduction <add>, %25, %cst_35 [1] : vector<8x128xf32> to vector<8xf32>
    %74 = vector.shape_cast %73 : vector<8xf32> to vector<8x1xf32>
    %75 = arith.addf %72, %74 : vector<8x1xf32>
    %c0_36 = arith.constant 0 : index
    %c0_37 = arith.constant 0 : index
    %76 = vector.load %arg17[%c0_36, %c0_37] : memref<8x1xf32, #tpu.memory_space<vmem>>, vector<8x1xf32>
    tpu.vector_store %arg17[%c0_36, %c0_37], %75 {strides = array<i32>} : memref<8x1xf32, #tpu.memory_space<vmem>>, vector<8x1xf32>,
    %c2_i32 = arith.constant 2 : i32
    %77 = arith.cmpi eq, %arg1, %c2_i32 : i32
    %78 = arith.extui %77 : i1 to i32
    %c0_i32_38 = arith.constant 0 : i32
    %79 = arith.cmpi ne, %78, %c0_i32_38 : i32
    scf.if %79 {
      %cst_39 = arith.constant 1.000000e+00 : f32
      %80 = vector.broadcast %cst_39 : f32 to vector<1x1xf32>
      %81 = arith.maximumf %1, %80 : vector<1x1xf32>
      %cst_40 = arith.constant 1.000000e+00 : f32
      %82 = vector.broadcast %cst_40 : f32 to vector<1x1xf32>
      %83 = arith.divf %82, %81 : vector<1x1xf32>
      %c0_41 = arith.constant 0 : index
      %c0_42 = arith.constant 0 : index
      %84 = vector.load %arg14[%c0_41, %c0_42] : memref<8x1xf32, #tpu.memory_space<vmem>>, vector<8x1xf32>
      %85 = arith.mulf %84, %7 : vector<8x1xf32>
      %cst_43 = arith.constant dense<0.000000e+00> : vector<1xf32>
      %86 = vector.multi_reduction <add>, %85, %cst_43 [0] : vector<8x1xf32> to vector<1xf32>
      %87 = vector.shape_cast %86 : vector<1xf32> to vector<1x1xf32>
      %cst_44 = arith.constant 0.00300300308 : f32
      %88 = vector.broadcast %cst_44 : f32 to vector<1x1xf32>
      %89 = arith.mulf %87, %88 : vector<1x1xf32>
      %90 = arith.mulf %89, %83 : vector<1x1xf32>
      %c0_45 = arith.constant 0 : index
      %c0_46 = arith.constant 0 : index
      %91 = vector.load %arg15[%c0_45, %c0_46] : memref<8x1xf32, #tpu.memory_space<vmem>>, vector<8x1xf32>
      %cst_47 = arith.constant 2.000000e+00 : f32
      %92 = vector.broadcast %cst_47 : f32 to vector<8x1xf32>
      %93 = arith.mulf %92, %91 : vector<8x1xf32>
      %c0_48 = arith.constant 0 : index
      %c0_49 = arith.constant 0 : index
      %94 = vector.load %arg16[%c0_48, %c0_49] : memref<8x1xf32, #tpu.memory_space<vmem>>, vector<8x1xf32>
      %c0_50 = arith.constant 0 : index
      %c0_51 = arith.constant 0 : index
      %95 = vector.load %arg17[%c0_50, %c0_51] : memref<8x1xf32, #tpu.memory_space<vmem>>, vector<8x1xf32>
      %96 = arith.addf %94, %95 : vector<8x1xf32>
      %cst_52 = arith.constant 1.000000e+00 : f32
      %97 = vector.broadcast %cst_52 : f32 to vector<8x1xf32>
      %98 = arith.addf %93, %97 : vector<8x1xf32>
      %cst_53 = arith.constant 1.000000e+00 : f32
      %99 = vector.broadcast %cst_53 : f32 to vector<8x1xf32>
      %100 = arith.addf %96, %99 : vector<8x1xf32>
      %101 = arith.divf %98, %100 : vector<8x1xf32>
      %cst_54 = arith.constant 1.000000e+00 : f32
      %102 = vector.broadcast %cst_54 : f32 to vector<8x1xf32>
      %103 = arith.subf %102, %101 : vector<8x1xf32>
      %104 = arith.mulf %103, %7 : vector<8x1xf32>
      %cst_55 = arith.constant dense<0.000000e+00> : vector<1xf32>
      %105 = vector.multi_reduction <add>, %104, %cst_55 [0] : vector<8x1xf32> to vector<1xf32>
      %106 = vector.shape_cast %105 : vector<1xf32> to vector<1x1xf32>
      %107 = arith.mulf %106, %83 : vector<1x1xf32>
      %c0_56 = arith.constant 0 : index
      %c0_57 = arith.constant 0 : index
      %c0_58 = arith.constant 0 : index
      %108 = vector.load %arg2[%c0_56, %c0_57, %c0_58] : memref<1x8x5xf32, #tpu.memory_space<vmem>>, vector<1x8x5xf32>
      %109 = vector.shape_cast %108 : vector<1x8x5xf32> to vector<8x5xf32>
      %c0_59 = arith.constant 0 : index
      %c0_60 = arith.constant 0 : index
      %110 = vector.load %arg3[%c0_59, %c0_60] : memref<1x5xf32, #tpu.memory_space<vmem>>, vector<1x5xf32>
      %cst_61 = arith.constant dense<0xFF800000> : vector<8xf32>
      %111 = vector.multi_reduction <maximumf>, %109, %cst_61 [1] : vector<8x5xf32> to vector<8xf32>
      %112 = vector.shape_cast %111 : vector<8xf32> to vector<8x1xf32>
      %113 = vector.broadcast %112 : vector<8x1xf32> to vector<8x5xf32>
      %114 = arith.subf %109, %113 : vector<8x5xf32>
      %115 = math.exp %114 : vector<8x5xf32>
      %cst_62 = arith.constant dense<0.000000e+00> : vector<8xf32>
      %116 = vector.multi_reduction <add>, %115, %cst_62 [1] : vector<8x5xf32> to vector<8xf32>
      %117 = vector.shape_cast %116 : vector<8xf32> to vector<8x1xf32>
      %118 = math.log %117 : vector<8x1xf32>
      %119 = arith.addf %118, %112 : vector<8x1xf32>
      %120 = vector.broadcast %119 : vector<8x1xf32> to vector<8x5xf32>
      %121 = arith.subf %109, %120 : vector<8x5xf32>
      %c0_63 = arith.constant 0 : index
      %c0_64 = arith.constant 0 : index
      %c0_65 = arith.constant 0 : index
      %122 = vector.load %arg4[%c0_63, %c0_64, %c0_65] : memref<1x8x1xi32, #tpu.memory_space<vmem>>, vector<1x8x1xi32>
      %123 = vector.shape_cast %122 : vector<1x8x1xi32> to vector<8x1xi32>
      %124 = tpu.iota {dimensions = array<i32: 1>} : vector<8x5xi32>
      %125 = vector.broadcast %123 : vector<8x1xi32> to vector<8x5xi32>
      %126 = arith.cmpi eq, %124, %125 : vector<8x5xi32>
      %127 = arith.extui %126 : vector<8x5xi1> to vector<8x5xi32>
      %128 = arith.sitofp %127 : vector<8x5xi32> to vector<8x5xf32>
      %129 = arith.mulf %121, %128 : vector<8x5xf32>
      %cst_66 = arith.constant dense<0.000000e+00> : vector<8xf32>
      %130 = vector.multi_reduction <add>, %129, %cst_66 [1] : vector<8x5xf32> to vector<8xf32>
      %131 = vector.shape_cast %130 : vector<8xf32> to vector<8x1xf32>
      %cst_67 = arith.constant 0.000000e+00 : f32
      %132 = vector.broadcast %cst_67 : f32 to vector<8x1xf32>
      %133 = arith.subf %132, %131 : vector<8x1xf32>
      %134 = vector.broadcast %110 : vector<1x5xf32> to vector<8x5xf32>
      %135 = arith.mulf %128, %134 : vector<8x5xf32>
      %cst_68 = arith.constant dense<0.000000e+00> : vector<8xf32>
      %136 = vector.multi_reduction <add>, %135, %cst_68 [1] : vector<8x5xf32> to vector<8xf32>
      %137 = vector.shape_cast %136 : vector<8xf32> to vector<8x1xf32>
      %c253_i32 = arith.constant 253 : i32
      %138 = vector.broadcast %c253_i32 : i32 to vector<8x1xi32>
      %139 = arith.cmpi ne, %123, %138 : vector<8x1xi32>
      %140 = arith.extui %139 : vector<8x1xi1> to vector<8x1xi32>
      %141 = arith.sitofp %140 : vector<8x1xi32> to vector<8x1xf32>
      %142 = arith.mulf %133, %137 : vector<8x1xf32>
      %143 = arith.mulf %142, %141 : vector<8x1xf32>
      %cst_69 = arith.constant dense<0.000000e+00> : vector<1xf32>
      %144 = vector.multi_reduction <add>, %143, %cst_69 [0] : vector<8x1xf32> to vector<1xf32>
      %145 = vector.shape_cast %144 : vector<1xf32> to vector<1x1xf32>
      %146 = arith.mulf %137, %141 : vector<8x1xf32>
      %cst_70 = arith.constant dense<0.000000e+00> : vector<1xf32>
      %147 = vector.multi_reduction <add>, %146, %cst_70 [0] : vector<8x1xf32> to vector<1xf32>
      %148 = vector.shape_cast %147 : vector<1xf32> to vector<1x1xf32>
      %c0_71 = arith.constant 0 : index
      %c0_72 = arith.constant 0 : index
      %c0_73 = arith.constant 0 : index
      %149 = vector.load %arg7[%c0_71, %c0_72, %c0_73] : memref<1x8x3xf32, #tpu.memory_space<vmem>>, vector<1x8x3xf32>
      %150 = vector.shape_cast %149 : vector<1x8x3xf32> to vector<8x3xf32>
      %c0_74 = arith.constant 0 : index
      %c0_75 = arith.constant 0 : index
      %c0_76 = arith.constant 0 : index
      %151 = vector.load %arg8[%c0_74, %c0_75, %c0_76] : memref<1x8x3xf32, #tpu.memory_space<vmem>>, vector<1x8x3xf32>
      %152 = vector.shape_cast %151 : vector<1x8x3xf32> to vector<8x3xf32>
      %c0_77 = arith.constant 0 : index
      %c0_78 = arith.constant 0 : index
      %c0_79 = arith.constant 0 : index
      %153 = vector.load %arg9[%c0_77, %c0_78, %c0_79] : memref<1x8x3xf32, #tpu.memory_space<vmem>>, vector<1x8x3xf32>
      %154 = vector.shape_cast %153 : vector<1x8x3xf32> to vector<8x3xf32>
      %c0_80 = arith.constant 0 : index
      %c0_81 = arith.constant 0 : index
      %c0_82 = arith.constant 0 : index
      %155 = vector.load %arg10[%c0_80, %c0_81, %c0_82] : memref<1x8x3xf32, #tpu.memory_space<vmem>>, vector<1x8x3xf32>
      %156 = vector.shape_cast %155 : vector<1x8x3xf32> to vector<8x3xf32>
      "tpu.trace_start"() <{level = 10 : i32, message = "tq,qd->td"}> : () -> ()
      %cst_83 = arith.constant dense<0.000000e+00> : vector<8x3xf32>
      %157 = tpu.matmul %16, %150, %cst_83 {dimension_numbers = #tpu.dot_dimension_numbers<[1], [0], [0], [1], [0, 0, 1, 1], [], []>} : vector<8x8xf32>, vector<8x3xf32>, vector<8x3xf32> -> vector<8x3xf32>
      %cst_84 = arith.constant dense<0.000000e+00> : vector<8x3xf32>
      %158 = tpu.matmul %16, %152, %cst_84 {dimension_numbers = #tpu.dot_dimension_numbers<[1], [0], [0], [1], [0, 0, 1, 1], [], []>} : vector<8x8xf32>, vector<8x3xf32>, vector<8x3xf32> -> vector<8x3xf32>
      "tpu.trace_stop"() : () -> ()
      %159 = arith.subf %157, %154 : vector<8x3xf32>
      %160 = math.absf %159 : vector<8x3xf32>
      %cst_85 = arith.constant dense<0.000000e+00> : vector<8xf32>
      %161 = vector.multi_reduction <add>, %160, %cst_85 [1] : vector<8x3xf32> to vector<8xf32>
      %162 = vector.shape_cast %161 : vector<8xf32> to vector<8x1xf32>
      %163 = arith.mulf %162, %7 : vector<8x1xf32>
      %cst_86 = arith.constant dense<0.000000e+00> : vector<1xf32>
      %164 = vector.multi_reduction <add>, %163, %cst_86 [0] : vector<8x1xf32> to vector<1xf32>
      %165 = vector.shape_cast %164 : vector<1xf32> to vector<1x1xf32>
      %166 = arith.mulf %165, %83 : vector<1x1xf32>
      %167 = arith.subf %158, %156 : vector<8x3xf32>
      %168 = math.absf %167 : vector<8x3xf32>
      %cst_87 = arith.constant dense<0.000000e+00> : vector<8xf32>
      %169 = vector.multi_reduction <add>, %168, %cst_87 [1] : vector<8x3xf32> to vector<8xf32>
      %170 = vector.shape_cast %169 : vector<8xf32> to vector<8x1xf32>
      %171 = arith.mulf %170, %7 : vector<8x1xf32>
      %cst_88 = arith.constant dense<0.000000e+00> : vector<1xf32>
      %172 = vector.multi_reduction <add>, %171, %cst_88 [0] : vector<8x1xf32> to vector<1xf32>
      %173 = vector.shape_cast %172 : vector<1xf32> to vector<1x1xf32>
      %174 = arith.mulf %173, %83 : vector<1x1xf32>
      %175 = tpu.iota {dimensions = array<i32: 1>} : vector<8x128xi32>
      %176 = tpu.iota {dimensions = array<i32: 0>} : vector<8x128xi32>
      %c0_i32_89 = arith.constant 0 : i32
      %177 = vector.broadcast %c0_i32_89 : i32 to vector<8x128xi32>
      %178 = arith.cmpi eq, %176, %177 : vector<8x128xi32>
      %c0_i32_90 = arith.constant 0 : i32
      %179 = vector.broadcast %c0_i32_90 : i32 to vector<8x128xi32>
      %180 = arith.cmpi eq, %175, %179 : vector<8x128xi32>
      %181 = arith.andi %178, %180 : vector<8x128xi1>
      %182 = arith.extui %181 : vector<8x128xi1> to vector<8x128xi32>
      %183 = arith.sitofp %182 : vector<8x128xi32> to vector<8x128xf32>
      %184 = vector.broadcast %145 : vector<1x1xf32> to vector<8x128xf32>
      %185 = arith.mulf %184, %183 : vector<8x128xf32>
      %c0_i32_91 = arith.constant 0 : i32
      %186 = vector.broadcast %c0_i32_91 : i32 to vector<8x128xi32>
      %187 = arith.cmpi eq, %176, %186 : vector<8x128xi32>
      %c1_i32 = arith.constant 1 : i32
      %188 = vector.broadcast %c1_i32 : i32 to vector<8x128xi32>
      %189 = arith.cmpi eq, %175, %188 : vector<8x128xi32>
      %190 = arith.andi %187, %189 : vector<8x128xi1>
      %191 = arith.extui %190 : vector<8x128xi1> to vector<8x128xi32>
      %192 = arith.sitofp %191 : vector<8x128xi32> to vector<8x128xf32>
      %193 = vector.broadcast %148 : vector<1x1xf32> to vector<8x128xf32>
      %194 = arith.mulf %193, %192 : vector<8x128xf32>
      %195 = arith.addf %185, %194 : vector<8x128xf32>
      %c0_i32_92 = arith.constant 0 : i32
      %196 = vector.broadcast %c0_i32_92 : i32 to vector<8x128xi32>
      %197 = arith.cmpi eq, %176, %196 : vector<8x128xi32>
      %c2_i32_93 = arith.constant 2 : i32
      %198 = vector.broadcast %c2_i32_93 : i32 to vector<8x128xi32>
      %199 = arith.cmpi eq, %175, %198 : vector<8x128xi32>
      %200 = arith.andi %197, %199 : vector<8x128xi1>
      %201 = arith.extui %200 : vector<8x128xi1> to vector<8x128xi32>
      %202 = arith.sitofp %201 : vector<8x128xi32> to vector<8x128xf32>
      %203 = vector.broadcast %90 : vector<1x1xf32> to vector<8x128xf32>
      %204 = arith.mulf %203, %202 : vector<8x128xf32>
      %205 = arith.addf %195, %204 : vector<8x128xf32>
      %c0_i32_94 = arith.constant 0 : i32
      %206 = vector.broadcast %c0_i32_94 : i32 to vector<8x128xi32>
      %207 = arith.cmpi eq, %176, %206 : vector<8x128xi32>
      %c3_i32 = arith.constant 3 : i32
      %208 = vector.broadcast %c3_i32 : i32 to vector<8x128xi32>
      %209 = arith.cmpi eq, %175, %208 : vector<8x128xi32>
      %210 = arith.andi %207, %209 : vector<8x128xi1>
      %211 = arith.extui %210 : vector<8x128xi1> to vector<8x128xi32>
      %212 = arith.sitofp %211 : vector<8x128xi32> to vector<8x128xf32>
      %213 = vector.broadcast %107 : vector<1x1xf32> to vector<8x128xf32>
      %214 = arith.mulf %213, %212 : vector<8x128xf32>
      %215 = arith.addf %205, %214 : vector<8x128xf32>
      %c0_i32_95 = arith.constant 0 : i32
      %216 = vector.broadcast %c0_i32_95 : i32 to vector<8x128xi32>
      %217 = arith.cmpi eq, %176, %216 : vector<8x128xi32>
      %c4_i32 = arith.constant 4 : i32
      %218 = vector.broadcast %c4_i32 : i32 to vector<8x128xi32>
      %219 = arith.cmpi eq, %175, %218 : vector<8x128xi32>
      %220 = arith.andi %217, %219 : vector<8x128xi1>
      %221 = arith.extui %220 : vector<8x128xi1> to vector<8x128xi32>
      %222 = arith.sitofp %221 : vector<8x128xi32> to vector<8x128xf32>
      %223 = vector.broadcast %166 : vector<1x1xf32> to vector<8x128xf32>
      %224 = arith.mulf %223, %222 : vector<8x128xf32>
      %225 = arith.addf %215, %224 : vector<8x128xf32>
      %c0_i32_96 = arith.constant 0 : i32
      %226 = vector.broadcast %c0_i32_96 : i32 to vector<8x128xi32>
      %227 = arith.cmpi eq, %176, %226 : vector<8x128xi32>
      %c5_i32 = arith.constant 5 : i32
      %228 = vector.broadcast %c5_i32 : i32 to vector<8x128xi32>
      %229 = arith.cmpi eq, %175, %228 : vector<8x128xi32>
      %230 = arith.andi %227, %229 : vector<8x128xi1>
      %231 = arith.extui %230 : vector<8x128xi1> to vector<8x128xi32>
      %232 = arith.sitofp %231 : vector<8x128xi32> to vector<8x128xf32>
      %233 = vector.broadcast %174 : vector<1x1xf32> to vector<8x128xf32>
      %234 = arith.mulf %233, %232 : vector<8x128xf32>
      %235 = arith.addf %225, %234 : vector<8x128xf32>
      %c0_97 = arith.constant 0 : index
      %c0_98 = arith.constant 0 : index
      %c0_99 = arith.constant 0 : index
      %236 = vector.load %arg13[%c0_97, %c0_98, %c0_99] : memref<1x8x128xf32, #tpu.memory_space<vmem>>, vector<1x8x128xf32>
      %237 = vector.shape_cast %236 : vector<1x8x128xf32> to vector<8x128xf32>
      %238 = vector.shape_cast %235 : vector<8x128xf32> to vector<1x8x128xf32>
      tpu.vector_store %arg13[%c0_97, %c0_98, %c0_99], %238 {strides = array<i32>} : memref<1x8x128xf32, #tpu.memory_space<vmem>>, vector<1x8x128xf32>,
    } else {
    }
    return
  }
  func.func @transform_0(%arg0: i32, %arg1: i32) -> (i32, i32, i32) {
    %c0_i32 = arith.constant 0 : i32
    %c0_i32_0 = arith.constant 0 : i32
    %c0_i32_1 = arith.constant 0 : i32
    return %arg0, %c0_i32, %c0_i32_0 : i32, i32, i32
  }
  func.func @transform_1(%arg0: i32, %arg1: i32) -> (i32, i32) {
    %c0_i32 = arith.constant 0 : i32
    %c0_i32_0 = arith.constant 0 : i32
    %c0_i32_1 = arith.constant 0 : i32
    return %c0_i32, %c0_i32_0 : i32, i32
  }
  func.func @transform_2(%arg0: i32, %arg1: i32) -> (i32, i32, i32) {
    %c0_i32 = arith.constant 0 : i32
    %c0_i32_0 = arith.constant 0 : i32
    %c0_i32_1 = arith.constant 0 : i32
    return %arg0, %c0_i32, %c0_i32_0 : i32, i32, i32
  }
  func.func @transform_3(%arg0: i32, %arg1: i32) -> (i32, i32, i32) {
    %c0_i32 = arith.constant 0 : i32
    %c0_i32_0 = arith.constant 0 : i32
    return %arg0, %arg1, %c0_i32 : i32, i32, i32
  }
  func.func @transform_4(%arg0: i32, %arg1: i32) -> (i32, i32, i32) {
    %c0_i32 = arith.constant 0 : i32
    %c0_i32_0 = arith.constant 0 : i32
    return %arg0, %c0_i32, %arg1 : i32, i32, i32
  }
  func.func @transform_5(%arg0: i32, %arg1: i32) -> (i32, i32, i32) {
    %c0_i32 = arith.constant 0 : i32
    %c0_i32_0 = arith.constant 0 : i32
    %c0_i32_1 = arith.constant 0 : i32
    return %arg0, %c0_i32, %c0_i32_0 : i32, i32, i32
  }
  func.func @transform_6(%arg0: i32, %arg1: i32) -> (i32, i32, i32) {
    %c0_i32 = arith.constant 0 : i32
    %c0_i32_0 = arith.constant 0 : i32
    %c0_i32_1 = arith.constant 0 : i32
    return %arg0, %c0_i32, %c0_i32_0 : i32, i32, i32
  }
  func.func @transform_7(%arg0: i32, %arg1: i32) -> (i32, i32, i32) {
    %c0_i32 = arith.constant 0 : i32
    %c0_i32_0 = arith.constant 0 : i32
    %c0_i32_1 = arith.constant 0 : i32
    return %arg0, %c0_i32, %c0_i32_0 : i32, i32, i32
  }
  func.func @transform_8(%arg0: i32, %arg1: i32) -> (i32, i32, i32) {
    %c0_i32 = arith.constant 0 : i32
    %c0_i32_0 = arith.constant 0 : i32
    %c0_i32_1 = arith.constant 0 : i32
    return %arg0, %c0_i32, %c0_i32_0 : i32, i32, i32
  }
  func.func @transform_9(%arg0: i32, %arg1: i32) -> (i32, i32, i32) {
    %c0_i32 = arith.constant 0 : i32
    %c0_i32_0 = arith.constant 0 : i32
    %c0_i32_1 = arith.constant 0 : i32
    return %arg0, %c0_i32, %c0_i32_0 : i32, i32, i32
  }
  func.func @transform_10(%arg0: i32, %arg1: i32) -> (i32, i32, i32) {
    %c0_i32 = arith.constant 0 : i32
    %c0_i32_0 = arith.constant 0 : i32
    %c0_i32_1 = arith.constant 0 : i32
    return %arg0, %c0_i32, %c0_i32_0 : i32, i32, i32
  }
  func.func @transform_11(%arg0: i32, %arg1: i32) -> (i32, i32, i32) {
    %c0_i32 = arith.constant 0 : i32
    %c0_i32_0 = arith.constant 0 : i32
    %c0_i32_1 = arith.constant 0 : i32
    return %arg0, %c0_i32, %c0_i32_0 : i32, i32, i32
  }
}

</mosaic_0001>

<llo_original>
// kernel: _fused_forward.1
$region0: #{_fused_forward.1}
  #allocation0 [shape = 'u32[]', space=smem, size = 0x4, offset = 0x4, fixed_abs, tag = 'smem constant byte address 0x4 - core index']
  #allocation1 [shape = 'u32[144,128]{1,0:T(1,128)}', space=vmem, size = 0x12000, scoped, tag = 'internal scratch']
  #allocation2 [shape = 'f32[8,1]{1,0:T(8,128)}', space=vmem, size = 0x1000, scoped, tag = 'scratch operand']
  #allocation3 [shape = 'f32[8,1]{1,0:T(8,128)}', space=vmem, size = 0x1000, scoped, tag = 'scratch operand']
  #allocation4 [shape = 'f32[8,1]{1,0:T(8,128)}', space=vmem, size = 0x1000, scoped, tag = 'scratch operand']
  #allocation5 [shape = 'f32[8,1]{1,0:T(8,128)}', space=vmem, size = 0x1000, scoped, tag = 'scratch operand']
  %s0 = inlined_call_operand.vmem [shape: f32[2,8,5], index: 0, kind: input, shape index: {}]
  %s1 = inlined_call_operand.vmem [shape: f32[1,5], index: 1, kind: input, shape index: {}]
  %s2 = inlined_call_operand.vmem [shape: s32[2,8,1], index: 2, kind: input, shape index: {}]
  %s3 = inlined_call_operand.vmem [shape: f32[2,384,8], index: 3, kind: input, shape index: {}]
  %s4 = inlined_call_operand.vmem [shape: bf16[2,8,384], index: 4, kind: input, shape index: {}]
  %s5 = inlined_call_operand.vmem [shape: f32[2,8,3], index: 5, kind: input, shape index: {}]
  %s6 = inlined_call_operand.vmem [shape: f32[2,8,3], index: 6, kind: input, shape index: {}]
  %s7 = inlined_call_operand.vmem [shape: f32[2,8,3], index: 7, kind: input, shape index: {}]
  %s8 = inlined_call_operand.vmem [shape: f32[2,8,3], index: 8, kind: input, shape index: {}]
  %s9 = inlined_call_operand.vmem [shape: s32[2,8,1], index: 9, kind: input, shape index: {}]
  %s10 = inlined_call_operand.vmem [shape: f32[2,1,1], index: 10, kind: input, shape index: {}]
  %s11 = inlined_call_operand.vmem [shape: f32[2,8,128], index: 11, kind: output, shape index: {}]
  %s12 = sld [smem:[#allocation0]]
  $region85: #{_fused_forward.1} parent=0
    _
  %s14 = ssub.s32 1, %s12
  %s15 = scalar_select 0, %s14, %s12
  loop: start=0, step=1, limit=8
  $region2: #{_fused_forward.1} parent=0 // loop_pre_header
    _
  $region3: #{_fused_forward.1} parent=0 // loop_header
    %s17 = sphi 0, %s21
    %p18 = scmp.ge.s32.totalorder %s17, 8
    %s24 = sphi 0, %s36
    %s25 = sphi 0, %s32
    %s26 = sphi 0, %s24
    %s27 = sphi 0, %s25
    %s28 = sphi 0, %s26
    %s29 = sphi 0, %s27
    %s39 = sphi 0, %s41
    %s42 = sphi 0, %s39
    %s43 = sphi 0, %s42
    %s59 = sphi 0, %s43
    %s63 = sphi 0, %s63
    %s65 = sphi 0, %s63
    %s66 = sphi 0, %s65
    %s80 = sphi 0, %s66
    %s86 = sphi 0, %s88
    %s89 = sphi 0, %s86
    %s90 = sphi 0, %s89
    %s106 = sphi 0, %s90
    %s114 = sphi 0, %s116
    %s117 = sphi 0, %s114
    %s118 = sphi 0, %s117
    %s134 = sphi 0, %s118
    %s142 = sphi 0, %s144
    %s145 = sphi 0, %s142
    %s146 = sphi 0, %s145
    %s162 = sphi 0, %s146
    %s168 = sphi 0, %s170
    %s171 = sphi 0, %s168
    %s172 = sphi 0, %s171
    %s188 = sphi 0, %s172
    %s194 = sphi 0, %s196
    %s197 = sphi 0, %s194
    %s198 = sphi 0, %s197
    %s214 = sphi 0, %s198
    %s220 = sphi 0, %s222
    %s223 = sphi 0, %s220
    %s224 = sphi 0, %s223
    %s240 = sphi 0, %s224
    %s246 = sphi 0, %s248
    %s249 = sphi 0, %s246
    %s250 = sphi 0, %s249
    %s266 = sphi 0, %s250
    %s272 = sphi 0, %s274
    %s275 = sphi 0, %s272
    %s276 = sphi 0, %s275
    %s292 = sphi 0, %s276
    %s298 = sphi 0, %s300
    %s301 = sphi 0, %s298
    %s302 = sphi 0, %s301
    %s318 = sphi 0, %s302
    %s324 = sphi 0, %s326
    %s327 = sphi 0, %s324
    %s328 = sphi 0, %s327
    %s344 = sphi 0, %s328
  $region4: #{_fused_forward.1} parent=0 // loop_header_branch
    %20 = sbr.rel (%p18) target = $region8
  $region5: #{_fused_forward.1} parent=0 // loop_body
    %s22 = ssub.s32 %s17, 1
    %s23 = ssub.s32 %s17, 2
    %s30 = sadd.s32 1, %s25
    %p31 = scmp.ge.s32.totalorder %s30, 3
    %s32 = scalar_select %p31, 0, %s30
    %s33 = sadd.s32 1, %s24
    %s34 = scalar_select %p31, %s33, %s24
    %p35 = scmp.ge.s32.totalorder %s34, 2
    %s36 = scalar_select %p35, 0, %s34
    %s37 = ssub.s32 %s24, %s36
    %p38 = scmp.eq.s32.totalorder %s37, 0
    %s40 = sadd.s32 %s39, 1
    %s41 = scalar_select %p38, %s39, %s40
    %p44 = pneg %p38
    %p45 = scmp.eq.s32.totalorder %s17, 5
    %p46 = por %p44, %p45
    %p47 = scmp.ne.s32.totalorder %s39, %s42
    %p48 = scmp.eq.s32.totalorder %s17, 0
    %p49 = por %p47, %p48
    %p50 = scmp.ne.s32.totalorder %s39, %s42
    %p51 = scmp.eq.s32.totalorder %s22, 5
    %p52 = por %p50, %p51
    %p53 = scmp.ne.s32.totalorder %s42, %s43
    %p54 = scmp.eq.s32.totalorder %s22, 0
    %p55 = por %p53, %p54
    %p56 = scmp.ne.s32.totalorder %s42, %s43
    %p57 = scmp.eq.s32.totalorder %s23, 5
    %p58 = por %p56, %p57
    %p60 = scmp.ne.s32.totalorder %s43, %s59
    %p61 = scmp.eq.s32.totalorder %s23, 0
    %p62 = por %p60, %p61
    %s64 = sadd.s32 %s63, 1
    %p67 = scmp.eq.s32.totalorder %s17, 5
    %p68 = scmp.ne.s32.totalorder %s63, %s65
    %p69 = scmp.eq.s32.totalorder %s17, 0
    %p70 = por %p68, %p69
    %p71 = scmp.ne.s32.totalorder %s63, %s65
    %p72 = scmp.eq.s32.totalorder %s22, 5
    %p73 = por %p71, %p72
    %p74 = scmp.ne.s32.totalorder %s65, %s66
    %p75 = scmp.eq.s32.totalorder %s22, 0
    %p76 = por %p74, %p75
    %p77 = scmp.ne.s32.totalorder %s65, %s66
    %p78 = scmp.eq.s32.totalorder %s23, 5
    %p79 = por %p77, %p78
    %p81 = scmp.ne.s32.totalorder %s66, %s80
    %p82 = scmp.eq.s32.totalorder %s23, 0
    %p83 = por %p81, %p82
    %s84 = ssub.s32 %s24, %s36
    %p85 = scmp.eq.s32.totalorder %s84, 0
    %s87 = sadd.s32 %s86, 1
    %s88 = scalar_select %p85, %s86, %s87
    %p91 = pneg %p85
    %p92 = scmp.eq.s32.totalorder %s17, 5
    %p93 = por %p91, %p92
    %p94 = scmp.ne.s32.totalorder %s86, %s89
    %p95 = scmp.eq.s32.totalorder %s17, 0
    %p96 = por %p94, %p95
    %p97 = scmp.ne.s32.totalorder %s86, %s89
    %p98 = scmp.eq.s32.totalorder %s22, 5
    %p99 = por %p97, %p98
    %p100 = scmp.ne.s32.totalorder %s89, %s90
    %p101 = scmp.eq.s32.totalorder %s22, 0
    %p102 = por %p100, %p101
    %p103 = scmp.ne.s32.totalorder %s89, %s90
    %p104 = scmp.eq.s32.totalorder %s23, 5
    %p105 = por %p103, %p104
    %p107 = scmp.ne.s32.totalorder %s90, %s106
    %p108 = scmp.eq.s32.totalorder %s23, 0
    %p109 = por %p107, %p108
    %s110 = ssub.s32 %s24, %s36
    %s111 = ssub.s32 %s25, %s32
    %s112 = sor.u32 %s110, %s111
    %p113 = scmp.eq.s32.totalorder %s112, 0
    %s115 = sadd.s32 %s114, 1
    %s116 = scalar_select %p113, %s114, %s115
    %p119 = pneg %p113
    %p120 = scmp.eq.s32.totalorder %s17, 5
    %p121 = por %p119, %p120
    %p122 = scmp.ne.s32.totalorder %s114, %s117
    %p123 = scmp.eq.s32.totalorder %s17, 0
    %p124 = por %p122, %p123
    %p125 = scmp.ne.s32.totalorder %s114, %s117
    %p126 = scmp.eq.s32.totalorder %s22, 5
    %p127 = por %p125, %p126
    %p128 = scmp.ne.s32.totalorder %s117, %s118
    %p129 = scmp.eq.s32.totalorder %s22, 0
    %p130 = por %p128, %p129
    %p131 = scmp.ne.s32.totalorder %s117, %s118
    %p132 = scmp.eq.s32.totalorder %s23, 5
    %p133 = por %p131, %p132
    %p135 = scmp.ne.s32.totalorder %s118, %s134
    %p136 = scmp.eq.s32.totalorder %s23, 0
    %p137 = por %p135, %p136
    %s138 = ssub.s32 %s24, %s36
    %s139 = ssub.s32 %s25, %s32
    %s140 = sor.u32 %s138, %s139
    %p141 = scmp.eq.s32.totalorder %s140, 0
    %s143 = sadd.s32 %s142, 1
    %s144 = scalar_select %p141, %s142, %s143
    %p147 = pneg %p141
    %p148 = scmp.eq.s32.totalorder %s17, 5
    %p149 = por %p147, %p148
    %p150 = scmp.ne.s32.totalorder %s142, %s145
    %p151 = scmp.eq.s32.totalorder %s17, 0
    %p152 = por %p150, %p151
    %p153 = scmp.ne.s32.totalorder %s142, %s145
    %p154 = scmp.eq.s32.totalorder %s22, 5
    %p155 = por %p153, %p154
    %p156 = scmp.ne.s32.totalorder %s145, %s146
    %p157 = scmp.eq.s32.totalorder %s22, 0
    %p158 = por %p156, %p157
    %p159 = scmp.ne.s32.totalorder %s145, %s146
    %p160 = scmp.eq.s32.totalorder %s23, 5
    %p161 = por %p159, %p160
    %p163 = scmp.ne.s32.totalorder %s146, %s162
    %p164 = scmp.eq.s32.totalorder %s23, 0
    %p165 = por %p163, %p164
    %s166 = ssub.s32 %s24, %s36
    %p167 = scmp.eq.s32.totalorder %s166, 0
    %s169 = sadd.s32 %s168, 1
    %s170 = scalar_select %p167, %s168, %s169
    %p173 = pneg %p167
    %p174 = scmp.eq.s32.totalorder %s17, 5
    %p175 = por %p173, %p174
    %p176 = scmp.ne.s32.totalorder %s168, %s171
    %p177 = scmp.eq.s32.totalorder %s17, 0
    %p178 = por %p176, %p177
    %p179 = scmp.ne.s32.totalorder %s168, %s171
    %p180 = scmp.eq.s32.totalorder %s22, 5
    %p181 = por %p179, %p180
    %p182 = scmp.ne.s32.totalorder %s171, %s172
    %p183 = scmp.eq.s32.totalorder %s22, 0
    %p184 = por %p182, %p183
    %p185 = scmp.ne.s32.totalorder %s171, %s172
    %p186 = scmp.eq.s32.totalorder %s23, 5
    %p187 = por %p185, %p186
    %p189 = scmp.ne.s32.totalorder %s172, %s188
    %p190 = scmp.eq.s32.totalorder %s23, 0
    %p191 = por %p189, %p190
    %s192 = ssub.s32 %s24, %s36
    %p193 = scmp.eq.s32.totalorder %s192, 0
    %s195 = sadd.s32 %s194, 1
    %s196 = scalar_select %p193, %s194, %s195
    %p199 = pneg %p193
    %p200 = scmp.eq.s32.totalorder %s17, 5
    %p201 = por %p199, %p200
    %p202 = scmp.ne.s32.totalorder %s194, %s197
    %p203 = scmp.eq.s32.totalorder %s17, 0
    %p204 = por %p202, %p203
    %p205 = scmp.ne.s32.totalorder %s194, %s197
    %p206 = scmp.eq.s32.totalorder %s22, 5
    %p207 = por %p205, %p206
    %p208 = scmp.ne.s32.totalorder %s197, %s198
    %p209 = scmp.eq.s32.totalorder %s22, 0
    %p210 = por %p208, %p209
    %p211 = scmp.ne.s32.totalorder %s197, %s198
    %p212 = scmp.eq.s32.totalorder %s23, 5
    %p213 = por %p211, %p212
    %p215 = scmp.ne.s32.totalorder %s198, %s214
    %p216 = scmp.eq.s32.totalorder %s23, 0
    %p217 = por %p215, %p216
    %s218 = ssub.s32 %s24, %s36
    %p219 = scmp.eq.s32.totalorder %s218, 0
    %s221 = sadd.s32 %s220, 1
    %s222 = scalar_select %p219, %s220, %s221
    %p225 = pneg %p219
    %p226 = scmp.eq.s32.totalorder %s17, 5
    %p227 = por %p225, %p226
    %p228 = scmp.ne.s32.totalorder %s220, %s223
    %p229 = scmp.eq.s32.totalorder %s17, 0
    %p230 = por %p228, %p229
    %p231 = scmp.ne.s32.totalorder %s220, %s223
    %p232 = scmp.eq.s32.totalorder %s22, 5
    %p233 = por %p231, %p232
    %p234 = scmp.ne.s32.totalorder %s223, %s224
    %p235 = scmp.eq.s32.totalorder %s22, 0
    %p236 = por %p234, %p235
    %p237 = scmp.ne.s32.totalorder %s223, %s224
    %p238 = scmp.eq.s32.totalorder %s23, 5
    %p239 = por %p237, %p238
    %p241 = scmp.ne.s32.totalorder %s224, %s240
    %p242 = scmp.eq.s32.totalorder %s23, 0
    %p243 = por %p241, %p242
    %s244 = ssub.s32 %s24, %s36
    %p245 = scmp.eq.s32.totalorder %s244, 0
    %s247 = sadd.s32 %s246, 1
    %s248 = scalar_select %p245, %s246, %s247
    %p251 = pneg %p245
    %p252 = scmp.eq.s32.totalorder %s17, 5
    %p253 = por %p251, %p252
    %p254 = scmp.ne.s32.totalorder %s246, %s249
    %p255 = scmp.eq.s32.totalorder %s17, 0
    %p256 = por %p254, %p255
    %p257 = scmp.ne.s32.totalorder %s246, %s249
    %p258 = scmp.eq.s32.totalorder %s22, 5
    %p259 = por %p257, %p258
    %p260 = scmp.ne.s32.totalorder %s249, %s250
    %p261 = scmp.eq.s32.totalorder %s22, 0
    %p262 = por %p260, %p261
    %p263 = scmp.ne.s32.totalorder %s249, %s250
    %p264 = scmp.eq.s32.totalorder %s23, 5
    %p265 = por %p263, %p264
    %p267 = scmp.ne.s32.totalorder %s250, %s266
    %p268 = scmp.eq.s32.totalorder %s23, 0
    %p269 = por %p267, %p268
    %s270 = ssub.s32 %s24, %s36
    %p271 = scmp.eq.s32.totalorder %s270, 0
    %s273 = sadd.s32 %s272, 1
    %s274 = scalar_select %p271, %s272, %s273
    %p277 = pneg %p271
    %p278 = scmp.eq.s32.totalorder %s17, 5
    %p279 = por %p277, %p278
    %p280 = scmp.ne.s32.totalorder %s272, %s275
    %p281 = scmp.eq.s32.totalorder %s17, 0
    %p282 = por %p280, %p281
    %p283 = scmp.ne.s32.totalorder %s272, %s275
    %p284 = scmp.eq.s32.totalorder %s22, 5
    %p285 = por %p283, %p284
    %p286 = scmp.ne.s32.totalorder %s275, %s276
    %p287 = scmp.eq.s32.totalorder %s22, 0
    %p288 = por %p286, %p287
    %p289 = scmp.ne.s32.totalorder %s275, %s276
    %p290 = scmp.eq.s32.totalorder %s23, 5
    %p291 = por %p289, %p290
    %p293 = scmp.ne.s32.totalorder %s276, %s292
    %p294 = scmp.eq.s32.totalorder %s23, 0
    %p295 = por %p293, %p294
    %s296 = ssub.s32 %s24, %s36
    %p297 = scmp.eq.s32.totalorder %s296, 0
    %s299 = sadd.s32 %s298, 1
    %s300 = scalar_select %p297, %s298, %s299
    %p303 = pneg %p297
    %p304 = scmp.eq.s32.totalorder %s17, 5
    %p305 = por %p303, %p304
    %p306 = scmp.ne.s32.totalorder %s298, %s301
    %p307 = scmp.eq.s32.totalorder %s17, 0
    %p308 = por %p306, %p307
    %p309 = scmp.ne.s32.totalorder %s298, %s301
    %p310 = scmp.eq.s32.totalorder %s22, 5
    %p311 = por %p309, %p310
    %p312 = scmp.ne.s32.totalorder %s301, %s302
    %p313 = scmp.eq.s32.totalorder %s22, 0
    %p314 = por %p312, %p313
    %p315 = scmp.ne.s32.totalorder %s301, %s302
    %p316 = scmp.eq.s32.totalorder %s23, 5
    %p317 = por %p315, %p316
    %p319 = scmp.ne.s32.totalorder %s302, %s318
    %p320 = scmp.eq.s32.totalorder %s23, 0
    %p321 = por %p319, %p320
    %s322 = ssub.s32 %s24, %s36
    %p323 = scmp.eq.s32.totalorder %s322, 0
    %s325 = sadd.s32 %s324, 1
    %s326 = scalar_select %p323, %s324, %s325
    %p329 = pneg %p323
    %p330 = scmp.eq.s32.totalorder %s17, 5
    %p331 = por %p329, %p330
    %p332 = scmp.ne.s32.totalorder %s324, %s327
    %p333 = scmp.eq.s32.totalorder %s17, 0
    %p334 = por %p332, %p333
    %p335 = scmp.ne.s32.totalorder %s324, %s327
    %p336 = scmp.eq.s32.totalorder %s22, 5
    %p337 = por %p335, %p336
    %p338 = scmp.ne.s32.totalorder %s327, %s328
    %p339 = scmp.eq.s32.totalorder %s22, 0
    %p340 = por %p338, %p339
    %p341 = scmp.ne.s32.totalorder %s327, %s328
    %p342 = scmp.eq.s32.totalorder %s23, 5
    %p343 = por %p341, %p342
    %p345 = scmp.ne.s32.totalorder %s328, %s344
    %p346 = scmp.eq.s32.totalorder %s23, 0
    %p347 = por %p345, %p346
    %p348 = scmp.le.s32.totalorder 1, %s17
    %p349 = scmp.lt.s32.totalorder %s17, 7
    %p350 = pnand %p348, %p349
    %p351 = pneg %p350
    // Predicated region
    $region9: #{_fused_forward.1} parent=5 // pred_check
      _
    $region10: #{_fused_forward.1} parent=5 // pred_check_branch
      %353 = sbr.rel (%p350) target = $region12
    $region11: #{_fused_forward.1} parent=5 // pred_region
      %s354 = ssub.s32 %s17, 1
      // Predicated region
      $region13: #{_fused_forward.1} parent=11 // pred_check
        %p355 = pneg %p76
      $region14: #{_fused_forward.1} parent=11 // pred_check_branch
        %357 = sbr.rel (%p355) target = $region16
      $region15: #{_fused_forward.1} parent=11 // pred_region
        _
      $region16: #{_fused_forward.1} parent=11 // pred_fallthru
        _
    $region12: #{_fused_forward.1} parent=5 // pred_fallthru
      _
    %p358 = scmp.lt.s32.totalorder %s17, 6
    // Predicated region
    $region17: #{_fused_forward.1} parent=5 // pred_check
      %p359 = pneg %p358
    $region18: #{_fused_forward.1} parent=5 // pred_check_branch
      %361 = sbr.rel (%p359) target = $region20
    $region19: #{_fused_forward.1} parent=5 // pred_region
      // Predicated region
      $region21: #{_fused_forward.1} parent=19 // pred_check
        %p362 = pneg %p49
      $region22: #{_fused_forward.1} parent=19 // pred_check_branch
        %364 = sbr.rel (%p362) target = $region24
      $region23: #{_fused_forward.1} parent=19 // pred_region
        %p365 = scmp.lt.s32.totalorder %s24, 1
        %s366 = scalar_select %p365, %s24, 1
        %s367 = smul.addr %s366, 8
        %s368 = scalar_lea.vmem %s0, %s367
      $region24: #{_fused_forward.1} parent=19 // pred_fallthru
        _
      // Predicated region
      $region25: #{_fused_forward.1} parent=19 // pred_check
        %p369 = pneg %p96
      $region26: #{_fused_forward.1} parent=19 // pred_check_branch
        %371 = sbr.rel (%p369) target = $region28
      $region27: #{_fused_forward.1} parent=19 // pred_region
        %p372 = scmp.lt.s32.totalorder %s24, 1
        %s373 = scalar_select %p372, %s24, 1
        %s374 = smul.addr %s373, 8
        %s375 = scalar_lea.vmem %s2, %s374
      $region28: #{_fused_forward.1} parent=19 // pred_fallthru
        _
      // Predicated region
      $region29: #{_fused_forward.1} parent=19 // pred_check
        %p376 = pneg %p124
      $region30: #{_fused_forward.1} parent=19 // pred_check_branch
        %378 = sbr.rel (%p376) target = $region32
      $region31: #{_fused_forward.1} parent=19 // pred_region
        %s379 = smul.u32 16, %s25
        %p380 = scmp.lt.s32.totalorder %s24, 1
        %s381 = scalar_select %p380, %s24, 1
        %p382 = scmp.lt.s32.totalorder %s379, 47
        %s383 = scalar_select %p382, %s379, 47
        %s384 = smul.addr %s381, 48
        %s385 = sadd.s32 %s383, %s384
        %s386 = smul.addr %s385, 8
        %s387 = scalar_lea.vmem %s3, %s386
        %s388 = smul.u32 16, %s25
      $region32: #{_fused_forward.1} parent=19 // pred_fallthru
        _
      // Predicated region
      $region33: #{_fused_forward.1} parent=19 // pred_check
        %p389 = pneg %p152
      $region34: #{_fused_forward.1} parent=19 // pred_check_branch
        %391 = sbr.rel (%p389) target = $region36
      $region35: #{_fused_forward.1} parent=19 // pred_region
        %p392 = scmp.lt.s32.totalorder %s24, 1
        %s393 = scalar_select %p392, %s24, 1
        %p394 = scmp.lt.s32.totalorder %s25, 2
        %s395 = scalar_select %p394, %s25, 2
        %s396 = smul.addr %s393, 3
        %s397 = sadd.s32 %s395, %s396
        %s398 = smul.addr %s397, 4
        %s399 = scalar_lea.vmem %s4, %s398
      $region36: #{_fused_forward.1} parent=19 // pred_fallthru
        _
      // Predicated region
      $region37: #{_fused_forward.1} parent=19 // pred_check
        %p400 = pneg %p178
      $region38: #{_fused_forward.1} parent=19 // pred_check_branch
        %402 = sbr.rel (%p400) target = $region40
      $region39: #{_fused_forward.1} parent=19 // pred_region
        %p403 = scmp.lt.s32.totalorder %s24, 1
        %s404 = scalar_select %p403, %s24, 1
        %s405 = smul.addr %s404, 8
        %s406 = scalar_lea.vmem %s5, %s405
      $region40: #{_fused_forward.1} parent=19 // pred_fallthru
        _
      // Predicated region
      $region41: #{_fused_forward.1} parent=19 // pred_check
        %p407 = pneg %p204
      $region42: #{_fused_forward.1} parent=19 // pred_check_branch
        %409 = sbr.rel (%p407) target = $region44
      $region43: #{_fused_forward.1} parent=19 // pred_region
        %p410 = scmp.lt.s32.totalorder %s24, 1
        %s411 = scalar_select %p410, %s24, 1
        %s412 = smul.addr %s411, 8
        %s413 = scalar_lea.vmem %s6, %s412
      $region44: #{_fused_forward.1} parent=19 // pred_fallthru
        _
      // Predicated region
      $region45: #{_fused_forward.1} parent=19 // pred_check
        %p414 = pneg %p230
      $region46: #{_fused_forward.1} parent=19 // pred_check_branch
        %416 = sbr.rel (%p414) target = $region48
      $region47: #{_fused_forward.1} parent=19 // pred_region
        %p417 = scmp.lt.s32.totalorder %s24, 1
        %s418 = scalar_select %p417, %s24, 1
        %s419 = smul.addr %s418, 8
        %s420 = scalar_lea.vmem %s7, %s419
      $region48: #{_fused_forward.1} parent=19 // pred_fallthru
        _
      // Predicated region
      $region49: #{_fused_forward.1} parent=19 // pred_check
        %p421 = pneg %p256
      $region50: #{_fused_forward.1} parent=19 // pred_check_branch
        %423 = sbr.rel (%p421) target = $region52
      $region51: #{_fused_forward.1} parent=19 // pred_region
        %p424 = scmp.lt.s32.totalorder %s24, 1
        %s425 = scalar_select %p424, %s24, 1
        %s426 = smul.addr %s425, 8
        %s427 = scalar_lea.vmem %s8, %s426
      $region52: #{_fused_forward.1} parent=19 // pred_fallthru
        _
      // Predicated region
      $region53: #{_fused_forward.1} parent=19 // pred_check
        %p428 = pneg %p282
      $region54: #{_fused_forward.1} parent=19 // pred_check_branch
        %430 = sbr.rel (%p428) target = $region56
      $region55: #{_fused_forward.1} parent=19 // pred_region
        %p431 = scmp.lt.s32.totalorder %s24, 1
        %s432 = scalar_select %p431, %s24, 1
        %s433 = smul.addr %s432, 8
        %s434 = scalar_lea.vmem %s9, %s433
      $region56: #{_fused_forward.1} parent=19 // pred_fallthru
        _
      // Predicated region
      $region57: #{_fused_forward.1} parent=19 // pred_check
        %p435 = pneg %p308
      $region58: #{_fused_forward.1} parent=19 // pred_check_branch
        %437 = sbr.rel (%p435) target = $region60
      $region59: #{_fused_forward.1} parent=19 // pred_region
        %p438 = scmp.lt.s32.totalorder %s24, 1
        %s439 = scalar_select %p438, %s24, 1
        %s440 = scalar_lea.vmem %s10, %s439
      $region60: #{_fused_forward.1} parent=19 // pred_fallthru
        _
    $region20: #{_fused_forward.1} parent=5 // pred_fallthru
      _
    %p441 = scmp.le.s32.totalorder 1, %s17
    %p442 = scmp.lt.s32.totalorder %s17, 7
    %p443 = pnand %p441, %p442
    %p444 = pneg %p443
    // Predicated region
    $region61: #{_fused_forward.1} parent=5 // pred_check
      _
    $region62: #{_fused_forward.1} parent=5 // pred_check_branch
      %446 = sbr.rel (%p443) target = $region64
    $region63: #{_fused_forward.1} parent=5 // pred_region
      %s447 = ssub.s32 %s17, 1
      %p448 = scmp.lt.s32.totalorder %s26, 1
      %s449 = scalar_select %p448, %s26, 1
      %s450 = smul.addr %s449, 8
      %s451 = scalar_lea.vmem %s0, %s450
      %p452 = pneg %p55
      %p453 = pneg %p52
      %p454 = pneg %p76
      %p455 = pneg %p73
      %p456 = scmp.lt.s32.totalorder %s26, 1
      %s457 = scalar_select %p456, %s26, 1
      %s458 = smul.addr %s457, 8
      %s459 = scalar_lea.vmem %s2, %s458
      %p460 = pneg %p102
      %p461 = pneg %p99
      %s462 = smul.u32 16, %s27
      %p463 = scmp.lt.s32.totalorder %s26, 1
      %s464 = scalar_select %p463, %s26, 1
      %p465 = scmp.lt.s32.totalorder %s462, 47
      %s466 = scalar_select %p465, %s462, 47
      %s467 = smul.addr %s464, 48
      %s468 = sadd.s32 %s466, %s467
      %s469 = smul.addr %s468, 8
      %s470 = scalar_lea.vmem %s3, %s469
      %p471 = pneg %p130
      %p472 = pneg %p127
      %p473 = scmp.lt.s32.totalorder %s26, 1
      %s474 = scalar_select %p473, %s26, 1
      %p475 = scmp.lt.s32.totalorder %s27, 2
      %s476 = scalar_select %p475, %s27, 2
      %s477 = smul.addr %s474, 3
      %s478 = sadd.s32 %s476, %s477
      %s479 = smul.addr %s478, 4
      %s480 = scalar_lea.vmem %s4, %s479
      %p481 = pneg %p158
      %p482 = pneg %p155
      %p483 = scmp.lt.s32.totalorder %s26, 1
      %s484 = scalar_select %p483, %s26, 1
      %s485 = smul.addr %s484, 8
      %s486 = scalar_lea.vmem %s5, %s485
      %p487 = pneg %p184
      %p488 = pneg %p181
      %p489 = scmp.lt.s32.totalorder %s26, 1
      %s490 = scalar_select %p489, %s26, 1
      %s491 = smul.addr %s490, 8
      %s492 = scalar_lea.vmem %s6, %s491
      %p493 = pneg %p210
      %p494 = pneg %p207
      %p495 = scmp.lt.s32.totalorder %s26, 1
      %s496 = scalar_select %p495, %s26, 1
      %s497 = smul.addr %s496, 8
      %s498 = scalar_lea.vmem %s7, %s497
      %p499 = pneg %p236
      %p500 = pneg %p233
      %p501 = scmp.lt.s32.totalorder %s26, 1
      %s502 = scalar_select %p501, %s26, 1
      %s503 = smul.addr %s502, 8
      %s504 = scalar_lea.vmem %s8, %s503
      %p505 = pneg %p262
      %p506 = pneg %p259
      %p507 = scmp.lt.s32.totalorder %s26, 1
      %s508 = scalar_select %p507, %s26, 1
      %s509 = smul.addr %s508, 8
      %s510 = scalar_lea.vmem %s9, %s509
      %p511 = pneg %p288
      %p512 = pneg %p285
      %p513 = scmp.lt.s32.totalorder %s26, 1
      %s514 = scalar_select %p513, %s26, 1
      %s515 = scalar_lea.vmem %s10, %s514
      %p516 = pneg %p314
      %p517 = pneg %p311
      %p518 = pneg %p340
      %p519 = pneg %p337
      %p520 = scmp.lt.s32.totalorder %s26, 1
      %s521 = scalar_select %p520, %s26, 1
      %s522 = smul.addr %s521, 8
      %s523 = scalar_lea.vmem %s11, %s522
      %p524 = scmp.lt.s32.totalorder %s26, 1
      %s525 = scalar_select %p524, %s26, 1
      %s526 = smul.addr %s525, 8
      %s527 = scalar_lea.vmem %s0, %s526
      %p528 = scmp.lt.s32.totalorder %s26, 1
      %s529 = scalar_select %p528, %s26, 1
      %s530 = smul.addr %s529, 8
      %s531 = scalar_lea.vmem %s2, %s530
      %s532 = smul.u32 16, %s27
      %p533 = scmp.lt.s32.totalorder %s26, 1
      %s534 = scalar_select %p533, %s26, 1
      %p535 = scmp.lt.s32.totalorder %s532, 47
      %s536 = scalar_select %p535, %s532, 47
      %s537 = smul.addr %s534, 48
      %s538 = sadd.s32 %s536, %s537
      %s539 = smul.addr %s538, 8
      %s540 = scalar_lea.vmem %s3, %s539
      %s541 = smul.u32 16, %s27
      %p542 = scmp.lt.s32.totalorder %s26, 1
      %s543 = scalar_select %p542, %s26, 1
      %p544 = scmp.lt.s32.totalorder %s27, 2
      %s545 = scalar_select %p544, %s27, 2
      %s546 = smul.addr %s543, 3
      %s547 = sadd.s32 %s545, %s546
      %s548 = smul.addr %s547, 4
      %s549 = scalar_lea.vmem %s4, %s548
      %p550 = scmp.lt.s32.totalorder %s26, 1
      %s551 = scalar_select %p550, %s26, 1
      %s552 = smul.addr %s551, 8
      %s553 = scalar_lea.vmem %s5, %s552
      %p554 = scmp.lt.s32.totalorder %s26, 1
      %s555 = scalar_select %p554, %s26, 1
      %s556 = smul.addr %s555, 8
      %s557 = scalar_lea.vmem %s6, %s556
      %p558 = scmp.lt.s32.totalorder %s26, 1
      %s559 = scalar_select %p558, %s26, 1
      %s560 = smul.addr %s559, 8
      %s561 = scalar_lea.vmem %s7, %s560
      %p562 = scmp.lt.s32.totalorder %s26, 1
      %s563 = scalar_select %p562, %s26, 1
      %s564 = smul.addr %s563, 8
      %s565 = scalar_lea.vmem %s8, %s564
      %p566 = scmp.lt.s32.totalorder %s26, 1
      %s567 = scalar_select %p566, %s26, 1
      %s568 = smul.addr %s567, 8
      %s569 = scalar_lea.vmem %s9, %s568
      %p570 = scmp.lt.s32.totalorder %s26, 1
      %s571 = scalar_select %p570, %s26, 1
      %s572 = scalar_lea.vmem %s10, %s571
      %p573 = scmp.lt.s32.totalorder %s26, 1
      %s574 = scalar_select %p573, %s26, 1
      %s575 = smul.addr %s574, 8
      %s576 = scalar_lea.vmem %s11, %s575
      %v577 = vld [vmem:[%s572] sm:$0x1]
      %v578 = vlaneseq
      %v579 = vshrl.u32 %v578, 7
      %v580 = vcvt.s32.f32 %v579
      %v582 = vlaneseq
      %v583 = vshrl.u32 %v582, 7
      %v584 = vsub.s32 0, %v583
      %v585 = vrot.slane %v577, %v584
      %vm587 = vcmp.lt.f32.partialorder %v580, %v585
      %v588 = vsel %vm587, 1, 0
      %v589 = vcvt.s32.f32 %v588
      %v590 = vlaneseq
      %v591 = vand.u32 %v590, 127
      %v592 = vld [vmem:[%s569] sm:$0xff]
      %593 = vset.pattern.permute.xlu0 0
      %594 = vperm.xlu0 %593, %v592
      %v595 = vpop.permute.xlu0 %594
      %vm596 = vcmp.eq.s32.totalorder %v591, %v595
      %v597 = vsel %vm596, 1, 0
      %v598 = vcvt.s32.f32 %v597
      %600 = vset.pattern.permute.xlu0 0
      %601 = vperm.xlu0 %600, %v589
      %v602 = vpop.permute.xlu0 %601
      %v604 = vmul.f32 %v598, %v602
      %p605 = scmp.eq.s32.totalorder %s27, 0
      // Predicated region
      $region65: #{_fused_forward.1} parent=63 // pred_check
        %p606 = pneg %p605
      $region66: #{_fused_forward.1} parent=63 // pred_check_branch
        %608 = sbr.rel (%p606) target = $region68
      $region67: #{_fused_forward.1} parent=63 // pred_region
        %vm609 = vcmask 7168
        %610 = vst.msk [vmem:[#allocation2] sm:$0xff] %vm609, 0.0
        %611 = vst.msk [vmem:[#allocation3] sm:$0xff] %vm609, 0.0
        %612 = vst.msk [vmem:[#allocation4] sm:$0xff] %vm609, 0.0
        %613 = vst.msk [vmem:[#allocation5] sm:$0xff] %vm609, 0.0
      $region68: #{_fused_forward.1} parent=63 // pred_fallthru
        _
      %v614 = vld [vmem:[%s540] sm:$0xff]
      %v615 = vld [vmem:[%s540 + $0x8] sm:$0xff]
      %v616 = vld [vmem:[%s540 + $0x10] sm:$0xff]
      %v617 = vld [vmem:[%s540 + $0x18] sm:$0xff]
      %v618 = vld [vmem:[%s540 + $0x20] sm:$0xff]
      %v619 = vld [vmem:[%s540 + $0x28] sm:$0xff]
      %v620 = vld [vmem:[%s540 + $0x30] sm:$0xff]
      %v621 = vld [vmem:[%s540 + $0x38] sm:$0xff]
      %v622 = vld [vmem:[%s540 + $0x40] sm:$0xff]
      %v623 = vld [vmem:[%s540 + $0x48] sm:$0xff]
      %v624 = vld [vmem:[%s540 + $0x50] sm:$0xff]
      %v625 = vld [vmem:[%s540 + $0x58] sm:$0xff]
      %v626 = vld [vmem:[%s540 + $0x60] sm:$0xff]
      %v627 = vld [vmem:[%s540 + $0x68] sm:$0xff]
      %v628 = vld [vmem:[%s540 + $0x70] sm:$0xff]
      %v629 = vld [vmem:[%s540 + $0x78] sm:$0xff]
      %vm630 = vcmask 64512
      %v632 = vsel %vm630, %v604, 0
      %v635 = vsel %vm630, %v614, 0
      %v638 = vsel %vm630, %v615, 0
      %v641 = vsel %vm630, %v616, 0
      %v644 = vsel %vm630, %v617, 0
      %v647 = vsel %vm630, %v618, 0
      %v650 = vsel %vm630, %v619, 0
      %v653 = vsel %vm630, %v620, 0
      %v656 = vsel %vm630, %v621, 0
      %v659 = vsel %vm630, %v622, 0
      %v662 = vsel %vm630, %v623, 0
      %v665 = vsel %vm630, %v624, 0
      %v668 = vsel %vm630, %v625, 0
      %v671 = vsel %vm630, %v626, 0
      %v674 = vsel %vm630, %v627, 0
      %v677 = vsel %vm630, %v628, 0
      %v680 = vsel %vm630, %v629, 0
      %682 = vmatprep.subr.mxu0 0.0
      %683 = vmatpush1.xpose.msra.mxu0 %v635
      %684 = vmatprep.subr.mxu0 0.0
      %685 = vmatpush1.xpose.msra.mxu0 %v638
      %686 = vmatprep.subr.mxu0 0.0
      %687 = vmatpush1.xpose.msra.mxu0 %v641
      %688 = vmatprep.subr.mxu0 0.0
      %689 = vmatpush1.xpose.msra.mxu0 %v644
      %690 = vmatprep.subr.mxu0 0.0
      %691 = vmatpush1.xpose.msra.mxu0 %v647
      %692 = vmatprep.subr.mxu0 0.0
      %693 = vmatpush1.xpose.msra.mxu0 %v650
      %694 = vmatprep.subr.mxu0 0.0
      %695 = vmatpush1.xpose.msra.mxu0 %v653
      %696 = vmatprep.subr.mxu0 0.0
      %697 = vmatpush1.xpose.msra.mxu0 %v656
      %698 = vmatprep.subr.mxu0 0.0
      %699 = vmatpush1.xpose.msra.mxu0 %v659
      %700 = vmatprep.subr.mxu0 0.0
      %701 = vmatpush1.xpose.msra.mxu0 %v662
      %702 = vmatprep.subr.mxu0 0.0
      %703 = vmatpush1.xpose.msra.mxu0 %v665
      %704 = vmatprep.subr.mxu0 0.0
      %705 = vmatpush1.xpose.msra.mxu0 %v668
      %706 = vmatprep.subr.mxu0 0.0
      %707 = vmatpush1.xpose.msra.mxu0 %v671
      %708 = vmatprep.subr.mxu0 0.0
      %709 = vmatpush1.xpose.msra.mxu0 %v674
      %710 = vmatprep.subr.mxu0 0.0
      %711 = vmatpush1.xpose.msra.mxu0 %v677
      %712 = vmatprep.subr.mxu0 0.0
      %713 = vmatpush1.xpose.msra.mxu0 %v680
      %714 = vmatprep.subr.mxu0 0.0
      %715 = vmatpush1.xpose.msra.mxu0 0.0
      %716 = vmatprep.subr.mxu0 0.0
      %717 = vmatpush1.xpose.msra.mxu0 0.0
      %718 = vmatprep.subr.mxu0 0.0
      %719 = vmatpush1.xpose.msra.mxu0 0.0
      %720 = vmatprep.subr.mxu0 0.0
      %721 = vmatpush1.xpose.msra.mxu0 0.0
      %722 = vmatprep.subr.mxu0 0.0
      %723 = vmatpush1.xpose.msra.mxu0 0.0
      %724 = vmatprep.subr.mxu0 0.0
      %725 = vmatpush1.xpose.msra.mxu0 0.0
      %726 = vmatprep.subr.mxu0 0.0
      %727 = vmatpush1.xpose.msra.mxu0 0.0
      %728 = vmatprep.subr.mxu0 0.0
      %729 = vmatpush1.xpose.msra.mxu0 0.0
      %730 = vmatprep.subr.mxu0 0.0
      %731 = vmatpush1.xpose.msra.mxu0 0.0
      %732 = vmatprep.subr.mxu0 0.0
      %733 = vmatpush1.xpose.msra.mxu0 0.0
      %734 = vmatprep.subr.mxu0 0.0
      %735 = vmatpush1.xpose.msra.mxu0 0.0
      %736 = vmatprep.subr.mxu0 0.0
      %737 = vmatpush1.xpose.msra.mxu0 0.0
      %738 = vmatprep.subr.mxu0 0.0
      %739 = vmatpush1.xpose.msra.mxu0 0.0
      %740 = vmatprep.subr.mxu0 0.0
      %741 = vmatpush1.xpose.msra.mxu0 0.0
      %742 = vmatprep.subr.mxu0 0.0
      %743 = vmatpush1.xpose.msra.mxu0 0.0
      %744 = vmatprep.subr.mxu0 0.0
      %745 = vmatpush1.xpose.msra.mxu0 0.0
      %746 = vmatprep.mubr.f32.mxu0 0.0
      %747 = vmatmul.mubr.f32.gmra.mrb[0].mxu0 %v632
      %v748 = vpop.f32.mrb[0].mxu0
      %v749 = vadd.f32 0.0, %v748
      %v750 = vpop.f32.mrb[0].mxu0
      %751 = vdwg.mxu0
      %v752 = vld [vmem:[%s549] sm:$0xf]
      %v753 = vunpack.c.l.bf16 %v752
      %s754 = smul.u32 %s27, 128
      %v755 = vstv %s754
      %v756 = vadd.s32 %v591, %v755
      %vm757 = vcmp.lt.s32.totalorder %v756, 333
      %v758 = vsel %vm757, 1, 0
      %v759 = vcvt.s32.f32 %v758
      %v760 = vmul.f32 %v749, 0.5
      %v761 = vtanh.pop %v760
      %v762 = vmul.f32 %v761, 0.5
      %v763 = vadd.f32 %v762, 0.5
      %vm764 = vcmp.ge.f32.partialorder %v749, 0.0
      %v765 = vsub.f32 1.0, %v763
      %v766 = vsel %vm764, %v763, %v765
      %v767 = vmax.f32 %v749, 0.0
      %v768 = vmul.f32 %v749, %v753
      %v769 = vsub.f32 %v767, %v768
      %v770 = vlog2.pop %v766
      %v771 = vmul.f32 %v770, 0.6931472
      %v772 = vsub.f32 %v769, %v771
      %v773 = vmul.f32 %v772, %v759
      %v774 = vmul.f32 %v763, %v759
      %v775 = vld [vmem:[#allocation2] sm:$0xff]
      %776 = vadd.xlane.f32.xlu0 %v773
      %v777 = vpop.xlane.xlu0 %776
      %v778 = vadd.f32 %v775, %v777
      %vm779 = vcmask 7168
      %780 = vst.msk [vmem:[#allocation2] sm:$0xff] %vm779, %v778
      %v781 = vld [vmem:[#allocation3] sm:$0xff]
      %v782 = vmul.f32 %v774, %v753
      %783 = vadd.xlane.f32.xlu0 %v782
      %v784 = vpop.xlane.xlu0 %783
      %v785 = vadd.f32 %v781, %v784
      %786 = vst.msk [vmem:[#allocation3] sm:$0xff] %vm779, %v785
      %v787 = vld [vmem:[#allocation4] sm:$0xff]
      %788 = vadd.xlane.f32.xlu0 %v774
      %v789 = vpop.xlane.xlu0 %788
      %v790 = vadd.f32 %v787, %v789
      %791 = vst.msk [vmem:[#allocation4] sm:$0xff] %vm779, %v790
      %v792 = vld [vmem:[#allocation5] sm:$0xff]
      %793 = vadd.xlane.f32.xlu0 %v753
      %v794 = vpop.xlane.xlu0 %793
      %v795 = vadd.f32 %v792, %v794
      %796 = vst.msk [vmem:[#allocation5] sm:$0xff] %vm779, %v795
      %p797 = scmp.eq.s32.totalorder %s27, 2
      // Predicated region
      $region69: #{_fused_forward.1} parent=63 // pred_check
        %p798 = pneg %p797
      $region70: #{_fused_forward.1} parent=63 // pred_check_branch
        %800 = sbr.rel (%p798) target = $region72
      $region71: #{_fused_forward.1} parent=63 // pred_region
        %v801 = vmax.f32 %v577, 1.0
        %v802 = vrcp.pop %v801
        %v803 = vmul.f32 1.0, %v802
        %v804 = vld [vmem:[#allocation2] sm:$0xff]
        %v805 = vmul.f32 %v804, %v589
        %v806 = vsel %vm779, %v805, 0.0
        %v807 = vrot.slane %v806, 4
        %v808 = vadd.f32 %v806, %v807
        %v809 = vrot.slane %v808, 2
        %v810 = vadd.f32 %v808, %v809
        %v811 = vrot.slane %v810, 1
        %v812 = vadd.f32 %v810, %v811
        %v813 = vmul.f32 %v812, 0.003003003
        %v814 = vmul.f32 %v813, %v803
        %v815 = vld [vmem:[#allocation3] sm:$0xff]
        %v816 = vmul.f32 %v815, 2.0
        %v817 = vld [vmem:[#allocation4] sm:$0xff]
        %v818 = vld [vmem:[#allocation5] sm:$0xff]
        %v819 = vadd.f32 %v817, %v818
        %v820 = vadd.f32 %v816, 1.0
        %v821 = vadd.f32 %v819, 1.0
        %v822 = vrcp.pop %v821
        %v823 = vmul.f32 %v820, %v822
        %v824 = vsub.f32 1.0, %v823
        %v825 = vmul.f32 %v824, %v589
        %v826 = vsel %vm779, %v825, 0.0
        %v827 = vrot.slane %v826, 4
        %v828 = vadd.f32 %v826, %v827
        %v829 = vrot.slane %v828, 2
        %v830 = vadd.f32 %v828, %v829
        %v831 = vrot.slane %v830, 1
        %v832 = vadd.f32 %v830, %v831
        %v833 = vmul.f32 %v832, %v803
        %v834 = vld [vmem:[%s527] sm:$0xff]
        %v835 = vld [vmem:[%s1] sm:$0x1]
        %vm836 = vcmask 39936
        %v837 = vsel %vm836, %v834, -inf
        %838 = vmax.xlane.f32.xlu0 %v837
        %v839 = vpop.xlane.xlu0 %838
        %v840 = vsub.f32 %v834, %v839
        %v841 = vmul.f32 %v840, 1.442695
        %v842 = vpow.pop %v841
        %v843 = vsel %vm836, %v842, 0.0
        %844 = vadd.xlane.f32.xlu0 %v843
        %v845 = vpop.xlane.xlu0 %844
        %v846 = vlog2.pop %v845
        %v847 = vmul.f32 %v846, 0.6931472
        %v848 = vadd.f32 %v847, %v839
        %v849 = vsub.f32 %v834, %v848
        %v850 = vld [vmem:[%s531] sm:$0xff]
        %851 = vset.pattern.permute.xlu0 0
        %852 = vperm.xlu0 %851, %v850
        %v853 = vpop.permute.xlu0 %852
        %vm854 = vcmp.eq.s32.totalorder %v591, %v853
        %v855 = vsel %vm854, 1, 0
        %v856 = vcvt.s32.f32 %v855
        %v857 = vmul.f32 %v849, %v856
        %v858 = vsel %vm836, %v857, 0.0
        %859 = vadd.xlane.f32.xlu0 %v858
        %v860 = vpop.xlane.xlu0 %859
        %v861 = vsub.f32 0.0, %v860
        %v863 = vlaneseq
        %v864 = vshrl.u32 %v863, 7
        %v865 = vsub.s32 0, %v864
        %v866 = vrot.slane %v835, %v865
        %v868 = vmul.f32 %v856, %v866
        %v869 = vsel %vm836, %v868, 0.0
        %870 = vadd.xlane.f32.xlu0 %v869
        %v871 = vpop.xlane.xlu0 %870
        %vm872 = vcmp.ne.s32.totalorder %v850, 253
        %v873 = vsel %vm872, 1, 0
        %v874 = vcvt.s32.f32 %v873
        %v875 = vmul.f32 %v861, %v871
        %v876 = vmul.f32 %v875, %v874
        %v877 = vsel %vm779, %v876, 0.0
        %v878 = vrot.slane %v877, 4
        %v879 = vadd.f32 %v877, %v878
        %v880 = vrot.slane %v879, 2
        %v881 = vadd.f32 %v879, %v880
        %v882 = vrot.slane %v881, 1
        %v883 = vadd.f32 %v881, %v882
        %v884 = vmul.f32 %v871, %v874
        %v885 = vsel %vm779, %v884, 0.0
        %v886 = vrot.slane %v885, 4
        %v887 = vadd.f32 %v885, %v886
        %v888 = vrot.slane %v887, 2
        %v889 = vadd.f32 %v887, %v888
        %v890 = vrot.slane %v889, 1
        %v891 = vadd.f32 %v889, %v890
        %v892 = vld [vmem:[%s553] sm:$0xff]
        %v893 = vld [vmem:[%s557] sm:$0xff]
        %v894 = vld [vmem:[%s561] sm:$0xff]
        %v895 = vld [vmem:[%s565] sm:$0xff]
        %896 = vmatprep.subr.mxu0 0.0
        %897 = vmatpush1.msra.mxu0 %v892
        %898 = vmatprep.subr.mxu0 0.0
        %899 = vmatpush1.msra.mxu0 0.0
        %900 = vmatprep.subr.mxu0 0.0
        %901 = vmatpush1.msra.mxu0 0.0
        %902 = vmatprep.subr.mxu0 0.0
        %903 = vmatpush1.msra.mxu0 0.0
        %904 = vmatprep.subr.mxu0 0.0
        %905 = vmatpush1.msra.mxu0 0.0
        %906 = vmatprep.subr.mxu0 0.0
        %907 = vmatpush1.msra.mxu0 0.0
        %908 = vmatprep.subr.mxu0 0.0
        %909 = vmatpush1.msra.mxu0 0.0
        %910 = vmatprep.subr.mxu0 0.0
        %911 = vmatpush1.msra.mxu0 0.0
        %912 = vmatprep.subr.mxu0 0.0
        %913 = vmatpush1.msra.mxu0 0.0
        %914 = vmatprep.subr.mxu0 0.0
        %915 = vmatpush1.msra.mxu0 0.0
        %916 = vmatprep.subr.mxu0 0.0
        %917 = vmatpush1.msra.mxu0 0.0
        %918 = vmatprep.subr.mxu0 0.0
        %919 = vmatpush1.msra.mxu0 0.0
        %920 = vmatprep.subr.mxu0 0.0
        %921 = vmatpush1.msra.mxu0 0.0
        %922 = vmatprep.subr.mxu0 0.0
        %923 = vmatpush1.msra.mxu0 0.0
        %924 = vmatprep.subr.mxu0 0.0
        %925 = vmatpush1.msra.mxu0 0.0
        %926 = vmatprep.subr.mxu0 0.0
        %927 = vmatpush1.msra.mxu0 0.0
        %928 = vmatprep.subr.mxu0 0.0
        %929 = vmatpush1.msra.mxu0 0.0
        %930 = vmatprep.subr.mxu0 0.0
        %931 = vmatpush1.msra.mxu0 0.0
        %932 = vmatprep.subr.mxu0 0.0
        %933 = vmatpush1.msra.mxu0 0.0
        %934 = vmatprep.subr.mxu0 0.0
        %935 = vmatpush1.msra.mxu0 0.0
        %936 = vmatprep.subr.mxu0 0.0
        %937 = vmatpush1.msra.mxu0 0.0
        %938 = vmatprep.subr.mxu0 0.0
        %939 = vmatpush1.msra.mxu0 0.0
        %940 = vmatprep.subr.mxu0 0.0
        %941 = vmatpush1.msra.mxu0 0.0
        %942 = vmatprep.subr.mxu0 0.0
        %943 = vmatpush1.msra.mxu0 0.0
        %944 = vmatprep.subr.mxu0 0.0
        %945 = vmatpush1.msra.mxu0 0.0
        %946 = vmatprep.subr.mxu0 0.0
        %947 = vmatpush1.msra.mxu0 0.0
        %948 = vmatprep.subr.mxu0 0.0
        %949 = vmatpush1.msra.mxu0 0.0
        %950 = vmatprep.subr.mxu0 0.0
        %951 = vmatpush1.msra.mxu0 0.0
        %952 = vmatprep.subr.mxu0 0.0
        %953 = vmatpush1.msra.mxu0 0.0
        %954 = vmatprep.subr.mxu0 0.0
        %955 = vmatpush1.msra.mxu0 0.0
        %956 = vmatprep.subr.mxu0 0.0
        %957 = vmatpush1.msra.mxu0 0.0
        %958 = vmatprep.subr.mxu0 0.0
        %959 = vmatpush1.msra.mxu0 0.0
        %960 = vmatprep.mubr.f32.mxu0 0.0
        %961 = vmatmul.mubr.f32.gmra.mrb[0].mxu0 %v632
        %v962 = vpop.f32.mrb[0].mxu0
        %v963 = vadd.f32 0.0, %v962
        %v964 = vpop.f32.mrb[0].mxu0
        %965 = vdwg.mxu0
        %966 = vmatprep.subr.mxu0 0.0
        %967 = vmatpush1.msra.mxu0 %v893
        %968 = vmatprep.subr.mxu0 0.0
        %969 = vmatpush1.msra.mxu0 0.0
        %970 = vmatprep.subr.mxu0 0.0
        %971 = vmatpush1.msra.mxu0 0.0
        %972 = vmatprep.subr.mxu0 0.0
        %973 = vmatpush1.msra.mxu0 0.0
        %974 = vmatprep.subr.mxu0 0.0
        %975 = vmatpush1.msra.mxu0 0.0
        %976 = vmatprep.subr.mxu0 0.0
        %977 = vmatpush1.msra.mxu0 0.0
        %978 = vmatprep.subr.mxu0 0.0
        %979 = vmatpush1.msra.mxu0 0.0
        %980 = vmatprep.subr.mxu0 0.0
        %981 = vmatpush1.msra.mxu0 0.0
        %982 = vmatprep.subr.mxu0 0.0
        %983 = vmatpush1.msra.mxu0 0.0
        %984 = vmatprep.subr.mxu0 0.0
        %985 = vmatpush1.msra.mxu0 0.0
        %986 = vmatprep.subr.mxu0 0.0
        %987 = vmatpush1.msra.mxu0 0.0
        %988 = vmatprep.subr.mxu0 0.0
        %989 = vmatpush1.msra.mxu0 0.0
        %990 = vmatprep.subr.mxu0 0.0
        %991 = vmatpush1.msra.mxu0 0.0
        %992 = vmatprep.subr.mxu0 0.0
        %993 = vmatpush1.msra.mxu0 0.0
        %994 = vmatprep.subr.mxu0 0.0
        %995 = vmatpush1.msra.mxu0 0.0
        %996 = vmatprep.subr.mxu0 0.0
        %997 = vmatpush1.msra.mxu0 0.0
        %998 = vmatprep.subr.mxu0 0.0
        %999 = vmatpush1.msra.mxu0 0.0
        %1000 = vmatprep.subr.mxu0 0.0
        %1001 = vmatpush1.msra.mxu0 0.0
        %1002 = vmatprep.subr.mxu0 0.0
        %1003 = vmatpush1.msra.mxu0 0.0
        %1004 = vmatprep.subr.mxu0 0.0
        %1005 = vmatpush1.msra.mxu0 0.0
        %1006 = vmatprep.subr.mxu0 0.0
        %1007 = vmatpush1.msra.mxu0 0.0
        %1008 = vmatprep.subr.mxu0 0.0
        %1009 = vmatpush1.msra.mxu0 0.0
        %1010 = vmatprep.subr.mxu0 0.0
        %1011 = vmatpush1.msra.mxu0 0.0
        %1012 = vmatprep.subr.mxu0 0.0
        %1013 = vmatpush1.msra.mxu0 0.0
        %1014 = vmatprep.subr.mxu0 0.0
        %1015 = vmatpush1.msra.mxu0 0.0
        %1016 = vmatprep.subr.mxu0 0.0
        %1017 = vmatpush1.msra.mxu0 0.0
        %1018 = vmatprep.subr.mxu0 0.0
        %1019 = vmatpush1.msra.mxu0 0.0
        %1020 = vmatprep.subr.mxu0 0.0
        %1021 = vmatpush1.msra.mxu0 0.0
        %1022 = vmatprep.subr.mxu0 0.0
        %1023 = vmatpush1.msra.mxu0 0.0
        %1024 = vmatprep.subr.mxu0 0.0
        %1025 = vmatpush1.msra.mxu0 0.0
        %1026 = vmatprep.subr.mxu0 0.0
        %1027 = vmatpush1.msra.mxu0 0.0
        %1028 = vmatprep.subr.mxu0 0.0
        %1029 = vmatpush1.msra.mxu0 0.0
        %1030 = vmatprep.mubr.f32.mxu0 0.0
        %1031 = vmatmul.mubr.f32.gmra.mrb[0].mxu0 %v632
        %v1032 = vpop.f32.mrb[0].mxu0
        %v1033 = vadd.f32 0.0, %v1032
        %v1034 = vpop.f32.mrb[0].mxu0
        %1035 = vdwg.mxu0
        %v1036 = vsub.f32 %v963, %v894
        %v1037 = vand.u32 2147483647, %v1036
        %vm1038 = vcmask 23552
        %v1039 = vsel %vm1038, %v1037, 0.0
        %1040 = vadd.xlane.f32.xlu0 %v1039
        %v1041 = vpop.xlane.xlu0 %1040
        %v1042 = vmul.f32 %v1041, %v589
        %v1043 = vsel %vm779, %v1042, 0.0
        %v1044 = vrot.slane %v1043, 4
        %v1045 = vadd.f32 %v1043, %v1044
        %v1046 = vrot.slane %v1045, 2
        %v1047 = vadd.f32 %v1045, %v1046
        %v1048 = vrot.slane %v1047, 1
        %v1049 = vadd.f32 %v1047, %v1048
        %v1050 = vmul.f32 %v1049, %v803
        %v1051 = vsub.f32 %v1033, %v895
        %v1052 = vand.u32 2147483647, %v1051
        %v1053 = vsel %vm1038, %v1052, 0.0
        %1054 = vadd.xlane.f32.xlu0 %v1053
        %v1055 = vpop.xlane.xlu0 %1054
        %v1056 = vmul.f32 %v1055, %v589
        %v1057 = vsel %vm779, %v1056, 0.0
        %v1058 = vrot.slane %v1057, 4
        %v1059 = vadd.f32 %v1057, %v1058
        %v1060 = vrot.slane %v1059, 2
        %v1061 = vadd.f32 %v1059, %v1060
        %v1062 = vrot.slane %v1061, 1
        %v1063 = vadd.f32 %v1061, %v1062
        %v1064 = vmul.f32 %v1063, %v803
        %vm1065 = vcmp.eq.s32.totalorder %v579, 0
        %vm1066 = vcmp.eq.s32.totalorder %v591, 0
        %vm1067 = vmand %vm1065, %vm1066
        %v1068 = vsel %vm1067, 1, 0
        %v1069 = vcvt.s32.f32 %v1068
        %1071 = vset.pattern.permute.xlu0 0
        %1072 = vperm.xlu0 %1071, %v883
        %v1073 = vpop.permute.xlu0 %1072
        %v1075 = vmul.f32 %v1073, %v1069
        %vm1076 = vcmp.eq.s32.totalorder %v591, 1
        %vm1077 = vmand %vm1065, %vm1076
        %v1078 = vsel %vm1077, 1, 0
        %v1079 = vcvt.s32.f32 %v1078
        %1081 = vset.pattern.permute.xlu0 0
        %1082 = vperm.xlu0 %1081, %v891
        %v1083 = vpop.permute.xlu0 %1082
        %v1085 = vmul.f32 %v1083, %v1079
        %v1086 = vadd.f32 %v1075, %v1085
        %vm1087 = vcmp.eq.s32.totalorder %v591, 2
        %vm1088 = vmand %vm1065, %vm1087
        %v1089 = vsel %vm1088, 1, 0
        %v1090 = vcvt.s32.f32 %v1089
        %s1092 = vtos %v814
        %v1093 = vstv %s1092
        %v1095 = vmul.f32 %v1093, %v1090
        %v1096 = vadd.f32 %v1086, %v1095
        %vm1097 = vcmp.eq.s32.totalorder %v591, 3
        %vm1098 = vmand %vm1065, %vm1097
        %v1099 = vsel %vm1098, 1, 0
        %v1100 = vcvt.s32.f32 %v1099
        %s1102 = vtos %v833
        %v1103 = vstv %s1102
        %v1105 = vmul.f32 %v1103, %v1100
        %v1106 = vadd.f32 %v1096, %v1105
        %vm1107 = vcmp.eq.s32.totalorder %v591, 4
        %vm1108 = vmand %vm1065, %vm1107
        %v1109 = vsel %vm1108, 1, 0
        %v1110 = vcvt.s32.f32 %v1109
        %s1112 = vtos %v1050
        %v1113 = vstv %s1112
        %v1115 = vmul.f32 %v1113, %v1110
        %v1116 = vadd.f32 %v1106, %v1115
        %vm1117 = vcmp.eq.s32.totalorder %v591, 5
        %vm1118 = vmand %vm1065, %vm1117
        %v1119 = vsel %vm1118, 1, 0
        %v1120 = vcvt.s32.f32 %v1119
        %s1122 = vtos %v1064
        %v1123 = vstv %s1122
        %v1125 = vmul.f32 %v1123, %v1120
        %v1126 = vadd.f32 %v1116, %v1125
        %1127 = vst [vmem:[%s576] sm:$0xff] %v1126
      $region72: #{_fused_forward.1} parent=63 // pred_fallthru
        _
      %p1128 = scmp.lt.s32.totalorder %s26, 1
      %s1129 = scalar_select %p1128, %s26, 1
      %s1130 = smul.addr %s1129, 8
      %s1131 = scalar_lea.vmem %s11, %s1130
      // Predicated region
      $region73: #{_fused_forward.1} parent=63 // pred_check
        %p1132 = pneg %p337
      $region74: #{_fused_forward.1} parent=63 // pred_check_branch
        %1134 = sbr.rel (%p1132) target = $region76
      $region75: #{_fused_forward.1} parent=63 // pred_region
        _
      $region76: #{_fused_forward.1} parent=63 // pred_fallthru
        _
    $region64: #{_fused_forward.1} parent=5 // pred_fallthru
      _
    %p1135 = scmp.le.s32.totalorder 2, %s17
    // Predicated region
    $region77: #{_fused_forward.1} parent=5 // pred_check
      %p1136 = pneg %p1135
    $region78: #{_fused_forward.1} parent=5 // pred_check_branch
      %1138 = sbr.rel (%p1136) target = $region80
    $region79: #{_fused_forward.1} parent=5 // pred_region
      %s1139 = ssub.s32 %s17, 2
      // Predicated region
      $region81: #{_fused_forward.1} parent=79 // pred_check
        %p1140 = pneg %p343
      $region82: #{_fused_forward.1} parent=79 // pred_check_branch
        %1142 = sbr.rel (%p1140) target = $region84
      $region83: #{_fused_forward.1} parent=79 // pred_region
        %p1143 = scmp.lt.s32.totalorder %s28, 1
        %s1144 = scalar_select %p1143, %s28, 1
        %s1145 = smul.addr %s1144, 8
        %s1146 = scalar_lea.vmem %s11, %s1145
      $region84: #{_fused_forward.1} parent=79 // pred_fallthru
        _
    $region80: #{_fused_forward.1} parent=5 // pred_fallthru
      _
  $region6: #{_fused_forward.1} parent=0 // loop_footer
    %s21 = sadd.s32 1, %s17
  $region7: #{_fused_forward.1} parent=0 // loop_footer_branch
    %16 = sbr.rel target = $region3
  $region8: #{_fused_forward.1} parent=0 // loop_exit
    _

</llo_original>
